<compile_context>
chip_gen: v7x
topology: tpu7x:2x2x1
jax: 0.10.0
libtpu: 0.0.40
codegen_flags: <defaults>
</compile_context>

<pallas_src>
import jax
import jax.numpy as jnp
from jax.experimental import pallas as pl
from jax.experimental.pallas import tpu as pltpu


# Below this hidden size the two critics' layer-2/3 weights are fused into one
# block-diagonal matmul (a lone H-wide dot would underfill the 128 MXU lanes).
# At H >= 128 the split form avoids doubling the dominant matmul's work.
_FUSE_HIDDEN_BELOW = 128


def _round_up(x, m):
    return ((x + m - 1) // m) * m


def _mxu_precision(dtype):
    # Explicit so kernel numerics do not depend on jax_default_matmul_precision.
    return (jax.lax.Precision.HIGHEST if dtype == jnp.float32
            else jax.lax.Precision.DEFAULT)


# ----------------------------------------------------------------------------
# Kernels
# ----------------------------------------------------------------------------
def _fused_kernel(obs_ref, act_ref, w1o_ref, w1a_ref, b1_ref,
                  w2_ref, b2_ref, w3_ref, b3_ref, out_ref):
    """H < 128: both critics fused via stacked / block-diagonal weights."""
    cdt = w1o_ref.dtype                       # compute dtype (f32 or bf16)
    prec = _mxu_precision(cdt)
    # Layer 1: x @ W1 with the obs/action concat folded into two dots.
    h = (jnp.dot(obs_ref[...].astype(cdt), w1o_ref[...],
                 preferred_element_type=jnp.float32, precision=prec)
         + jnp.dot(act_ref[...].astype(cdt), w1a_ref[...],
                   preferred_element_type=jnp.float32, precision=prec)
         + b1_ref[...])
    h = jnp.maximum(h, 0.0)
    # Layer 2 (block-diagonal over the two critics -> one wide, lane-dense dot).
    h = jnp.maximum(
        jnp.dot(h.astype(cdt), w2_ref[...],
                preferred_element_type=jnp.float32, precision=prec)
        + b2_ref[...], 0.0)
    # Layer 3 -> (bt, 2): column 0 = Q1, column 1 = Q2.  Single store.
    out_ref[...] = (jnp.dot(h.astype(cdt), w3_ref[...],
                            preferred_element_type=jnp.float32, precision=prec)
                    + b3_ref[...]).astype(out_ref.dtype)


def _split_kernel(obs_ref, act_ref, w1o_ref, w1a_ref, b1_ref,
                  w2a_ref, b2a_ref, w2b_ref, b2b_ref,
                  w3a_ref, b3a_ref, w3b_ref, b3b_ref,
                  q1_ref, q2_ref):
    """H >= 128: shared stacked layer 1, per-critic layer 2/3 (no zero blocks)."""
    cdt = w1o_ref.dtype
    prec = _mxu_precision(cdt)
    hidden = w2a_ref.shape[0]
    # Layer 1 (stacked over both critics: output width 2H, lane-dense).
    h = (jnp.dot(obs_ref[...].astype(cdt), w1o_ref[...],
                 preferred_element_type=jnp.float32, precision=prec)
         + jnp.dot(act_ref[...].astype(cdt), w1a_ref[...],
                   preferred_element_type=jnp.float32, precision=prec)
         + b1_ref[...])
    h = jnp.maximum(h, 0.0)
    h1 = h[:, :hidden].astype(cdt)
    h2 = h[:, hidden:].astype(cdt)
    # Layer 2: two H-wide dots on the ORIGINAL (H,H) weights (no zero blocks).
    g1 = jnp.maximum(jnp.dot(h1, w2a_ref[...],
                             preferred_element_type=jnp.float32, precision=prec)
                     + b2a_ref[...], 0.0)
    g2 = jnp.maximum(jnp.dot(h2, w2b_ref[...],
                             preferred_element_type=jnp.float32, precision=prec)
                     + b2b_ref[...], 0.0)
    # Layer 3 (output width 1): cheaper as VPU mul + XLU lane-reduction than an
    # MXU pass with N=1.  w3 is stored as a (1, H) row.
    q1_ref[...] = (jnp.sum(g1 * w3a_ref[...], axis=-1, keepdims=True)
                   + b3a_ref[...]).astype(q1_ref.dtype)
    q2_ref[...] = (jnp.sum(g2 * w3b_ref[...], axis=-1, keepdims=True)
                   + b3b_ref[...]).astype(q2_ref.dtype)


# ----------------------------------------------------------------------------
# One-time parameter preparation (load time, NOT the per-forward hot path)
# ----------------------------------------------------------------------------
def prepare_double_critic_params(q1_params, q2_params, obs_dim, *,
                                 param_dtype=jnp.float32):
    """q*_params: PyTorch layout (w1 (H,in), b1 (H,), w2 (H,H), b2 (H,), w3 (1,H), b3 (1,)).

    Returns a dict with kernel-layout params.  Weights may be cast to bf16
    (param_dtype); biases stay f32 (accumulation is always f32).
    """
    w1_1, b1_1, w2_1, b2_1, w3_1, b3_1 = q1_params
    w1_2, b1_2, w2_2, b2_2, w3_2, b3_2 = q2_params
    hidden = int(w2_1.shape[0])

    # Stacked layer-1 weight (input_dim, 2H), split by obs/action rows so the
    # torch.cat([obs, action], -1) is folded into the matmul (no concat pass).
    w1_stack = jnp.concatenate([w1_1.T, w1_2.T], axis=1).astype(jnp.float32)
    w1o = w1_stack[:obs_dim].astype(param_dtype)       # (obs_dim, 2H)
    w1a = w1_stack[obs_dim:].astype(param_dtype)       # (act_dim, 2H)
    b1 = jnp.concatenate([b1_1, b1_2]).reshape(1, -1).astype(jnp.float32)

    if hidden < _FUSE_HIDDEN_BELOW:
        # Block-diagonal hidden->hidden / hidden->out (zero cross blocks): one
        # wide matmul per layer; only pays off when H underfills the MXU lanes.
        w2 = jax.scipy.linalg.block_diag(w2_1.T, w2_2.T).astype(param_dtype)  # (2H, 2H)
        b2 = jnp.concatenate([b2_1, b2_2]).reshape(1, -1).astype(jnp.float32)
        w3 = jax.scipy.linalg.block_diag(w3_1.T, w3_2.T).astype(param_dtype)  # (2H, 2)
        b3 = jnp.concatenate([b3_1, b3_2]).reshape(1, -1).astype(jnp.float32)
        weights = (w1o, w1a, b1, w2, b2, w3, b3)
        mode = "fused"
    else:
        weights = (w1o, w1a, b1,
                   w2_1.T.astype(param_dtype), b2_1.reshape(1, -1).astype(jnp.float32),
                   w2_2.T.astype(param_dtype), b2_2.reshape(1, -1).astype(jnp.float32),
                   w3_1.astype(param_dtype),   b3_1.reshape(1, 1).astype(jnp.float32),
                   w3_2.astype(param_dtype),   b3_2.reshape(1, 1).astype(jnp.float32))
        mode = "split"
    return {"mode": mode, "hidden": hidden, "weights": weights}


# ----------------------------------------------------------------------------
# Forward wrapper
# ----------------------------------------------------------------------------
def double_critic(obs, action, kernel_params, *, b_tile=512):
    """obs: (B, obs_dim), action: (B, act_dim) -> (q1, q2), each (B, 1) f32."""
    mode = kernel_params["mode"]
    hidden = kernel_params["hidden"]
    weights = kernel_params["weights"]

    B, obs_dim = obs.shape
    act_dim = action.shape[1]

    # Batch tiling: big tiles (multiple of 8) to amortize per-step overhead and
    # fill the MXU M dim, but keep >= 2 grid steps when possible so both v7x
    # TensorCores get work.  No jnp.pad: Pallas handles the ragged last block,
    # which is safe because every output row depends only on its own input row
    # (no cross-row reductions anywhere in the kernels).
    b_tile = _round_up(max(8, int(b_tile)), 8)
    b_tile = max(8, min(b_tile, _round_up(pl.cdiv(B, 2), 8)))
    n_tiles = pl.cdiv(B, b_tile)

    in_specs = [
        pl.BlockSpec((b_tile, obs_dim), lambda i: (i, 0)),
        pl.BlockSpec((b_tile, act_dim), lambda i: (i, 0)),
    ] + [pl.BlockSpec(w.shape, lambda i: (0, 0)) for w in weights]

    # VMEM budget: double-buffered I/O tiles + (double-buffered) resident
    # weights + live f32 activations (with headroom).  Explicit limit so large
    # tiles compile on the 16/32 MiB scoped defaults and stay under v7x's
    # 64 MiB physical VMEM.
    w_bytes = sum(int(w.size) * w.dtype.itemsize for w in weights)
    io_step = b_tile * (obs_dim + act_dim + 2) * 4
    act_step = 4 * b_tile * (2 * hidden) * 4
    vmem_limit = int(min(48 << 20, max(16 << 20, 2 * (2 * io_step + 2 * w_bytes + act_step))))

    compiler_params = pltpu.CompilerParams(
        dimension_semantics=("parallel",),
        vmem_limit_bytes=vmem_limit)

    bytes_accessed = int(4 * B * (obs_dim + act_dim) + w_bytes + 4 * B * 2)

    if mode == "fused":
        flops = int(2 * B * ((obs_dim + act_dim) * 2 * hidden
                             + (2 * hidden) * (2 * hidden)
                             + 2 * hidden * 2))
        out = pl.pallas_call(
            _fused_kernel,
            out_shape=jax.ShapeDtypeStruct((B, 2), jnp.float32),
            grid=(n_tiles,),
            in_specs=in_specs,
            out_specs=pl.BlockSpec((b_tile, 2), lambda i: (i, 0)),
            compiler_params=compiler_params,
            cost_estimate=pl.CostEstimate(
                flops=flops, transcendentals=0, bytes_accessed=bytes_accessed),
        )(obs, action, *weights)
        return out[:, 0:1], out[:, 1:2]

    # Split path (H >= 128): two (B, 1) outputs, no narrow concat in-kernel.
    flops = int(2 * B * ((obs_dim + act_dim) * 2 * hidden
                         + 2 * hidden * hidden
                         + 2 * hidden))
    q1, q2 = pl.pallas_call(
        _split_kernel,
        out_shape=(jax.ShapeDtypeStruct((B, 1), jnp.float32),
                   jax.ShapeDtypeStruct((B, 1), jnp.float32)),
        grid=(n_tiles,),
        in_specs=in_specs,
        out_specs=(pl.BlockSpec((b_tile, 1), lambda i: (i, 0)),
                   pl.BlockSpec((b_tile, 1), lambda i: (i, 0))),
        compiler_params=compiler_params,
        cost_estimate=pl.CostEstimate(
            flops=flops, transcendentals=0, bytes_accessed=bytes_accessed),
    )(obs, action, *weights)
    return q1, q2


# ----------------------------------------------------------------------------
# Pure-JAX reference (port of the PyTorch forward) for checking
# ----------------------------------------------------------------------------
def reference(obs, action, q1_params, q2_params):
    x = jnp.concatenate([obs, action], axis=-1)
    hi = jax.lax.Precision.HIGHEST

    def critic(p):
        w1, b1, w2, b2, w3, b3 = p
        h = jnp.maximum(jnp.dot(x, w1.T, precision=hi) + b1, 0.0)
        h = jnp.maximum(jnp.dot(h, w2.T, precision=hi) + b2, 0.0)
        return jnp.dot(h, w3.T, precision=hi) + b3

    return critic(q1_params), critic(q2_params)


# ----------------------------------------------------------------------------
if __name__ == "__main__":
    key = jax.random.PRNGKey(0)
    k = jax.random.split(key, 8)

    def u(kk, shape, fan_in):
        bound = 1.0 / float(fan_in) ** 0.5
        return jax.random.uniform(kk, shape, jnp.float32, -bound, bound)

    def make_critic(kk, input_dim, hidden):
        ks = jax.random.split(kk, 6)
        return (u(ks[0], (hidden, input_dim), input_dim),
                u(ks[1], (hidden,), input_dim),
                u(ks[2], (hidden, hidden), hidden),
                u(ks[3], (hidden,), hidden),
                u(ks[4], (1, hidden), hidden),
                u(ks[5], (1,), hidden))

    # ---- Test 1: module defaults (hidden_dim=10) -> fused block-diagonal path, f32.
    B, obs_dim, act_dim, hidden = 12, 6, 4, 10
    q1p = make_critic(k[0], obs_dim + act_dim, hidden)
    q2p = make_critic(k[1], obs_dim + act_dim, hidden)
    obs = jax.random.normal(k[2], (B, obs_dim), jnp.float32)
    act = jax.random.normal(k[3], (B, act_dim), jnp.float32)

    kp = prepare_double_critic_params(q1p, q2p, obs_dim)     # one-time, off hot path
    q1, q2 = jax.block_until_ready(double_critic(obs, act, kp))
    r1, r2 = reference(obs, act, q1p, q2p)
    assert q1.shape == (B, 1) and q2.shape == (B, 1), (q1.shape, q2.shape)
    assert q1.dtype == jnp.float32 and q2.dtype == jnp.float32
    assert jnp.allclose(q1, r1, atol=1e-4, rtol=1e-4), float(jnp.max(jnp.abs(q1 - r1)))
    assert jnp.allclose(q2, r2, atol=1e-4, rtol=1e-4), float(jnp.max(jnp.abs(q2 - r2)))

    # ---- Test 2: hidden_dim=128 -> split path (no block-diag), ragged last tile.
    B2, hidden2 = 40, 128
    q1p2 = make_critic(k[4], obs_dim + act_dim, hidden2)
    q2p2 = make_critic(k[5], obs_dim + act_dim, hidden2)
    obs2 = jax.random.normal(k[6], (B2, obs_dim), jnp.float32)
    act2 = jax.random.normal(k[7], (B2, act_dim), jnp.float32)
    kp2 = prepare_double_critic_params(q1p2, q2p2, obs_dim)
    s1, s2 = jax.block_until_ready(double_critic(obs2, act2, kp2))
    t1, t2 = reference(obs2, act2, q1p2, q2p2)
    assert s1.shape == (B2, 1) and s2.shape == (B2, 1), (s1.shape, s2.shape)
    assert jnp.allclose(s1, t1, atol=1e-4, rtol=1e-4), float(jnp.max(jnp.abs(s1 - t1)))
    assert jnp.allclose(s2, t2, atol=1e-4, rtol=1e-4), float(jnp.max(jnp.abs(s2 - t2)))

    # ---- Test 3: bf16 weights/activations on the MXU (f32 accumulation, f32 biases).
    kp_bf16 = prepare_double_critic_params(q1p, q2p, obs_dim,
                                           param_dtype=jnp.bfloat16)
    qb1, qb2 = jax.block_until_ready(double_critic(obs, act, kp_bf16))
    assert jnp.allclose(qb1, r1, atol=5e-2, rtol=5e-2)
    assert jnp.allclose(qb2, r2, atol=5e-2, rtol=5e-2)

    print("KERNEL_OK")
</pallas_src>

<mosaic_0001>
module attributes {stable_mosaic.version = 11 : i64} {
  func.func @_fused_kernel(%arg0: i32, %arg1: memref<8x6xf32, #tpu.memory_space<vmem>>, %arg2: memref<8x4xf32, #tpu.memory_space<vmem>>, %arg3: memref<6x20xf32, #tpu.memory_space<vmem>>, %arg4: memref<4x20xf32, #tpu.memory_space<vmem>>, %arg5: memref<1x20xf32, #tpu.memory_space<vmem>>, %arg6: memref<20x20xf32, #tpu.memory_space<vmem>>, %arg7: memref<1x20xf32, #tpu.memory_space<vmem>>, %arg8: memref<20x2xf32, #tpu.memory_space<vmem>>, %arg9: memref<1x2xf32, #tpu.memory_space<vmem>>, %arg10: memref<8x2xf32, #tpu.memory_space<vmem>>) attributes {dimension_semantics = [#tpu.dimension_semantics<parallel>], iteration_bounds = array<i64: 2>, scalar_prefetch = 0 : i64, scratch_operands = 0 : i64, tpu.core_type = #tpu.core_type<tc>, window_params = [{transform_indices = @transform_0, window_bounds = array<i64: 8, 6>}, {transform_indices = @transform_1, window_bounds = array<i64: 8, 4>}, {pipeline_mode = #tpu.pipeline_mode<synchronous>, transform_indices = @transform_2, window_bounds = array<i64: 6, 20>}, {pipeline_mode = #tpu.pipeline_mode<synchronous>, transform_indices = @transform_3, window_bounds = array<i64: 4, 20>}, {pipeline_mode = #tpu.pipeline_mode<synchronous>, transform_indices = @transform_4, window_bounds = array<i64: 1, 20>}, {pipeline_mode = #tpu.pipeline_mode<synchronous>, transform_indices = @transform_5, window_bounds = array<i64: 20, 20>}, {pipeline_mode = #tpu.pipeline_mode<synchronous>, transform_indices = @transform_6, window_bounds = array<i64: 1, 20>}, {pipeline_mode = #tpu.pipeline_mode<synchronous>, transform_indices = @transform_7, window_bounds = array<i64: 20, 2>}, {pipeline_mode = #tpu.pipeline_mode<synchronous>, transform_indices = @transform_8, window_bounds = array<i64: 1, 2>}, {transform_indices = @transform_9, window_bounds = array<i64: 8, 2>}]} {
    %c0 = arith.constant 0 : index
    %c0_0 = arith.constant 0 : index
    %0 = vector.load %arg1[%c0, %c0_0] : memref<8x6xf32, #tpu.memory_space<vmem>>, vector<8x6xf32>
    %c0_1 = arith.constant 0 : index
    %c0_2 = arith.constant 0 : index
    %1 = vector.load %arg3[%c0_1, %c0_2] : memref<6x20xf32, #tpu.memory_space<vmem>>, vector<6x20xf32>
    %cst = arith.constant dense<0.000000e+00> : vector<8x20xf32>
    %2 = tpu.matmul %0, %1, %cst {dimension_numbers = #tpu.dot_dimension_numbers<[1], [0], [0], [1], [0, 0, 1, 1], [], []>, precision = #tpu.contract_precision<fp32>} : vector<8x6xf32>, vector<6x20xf32>, vector<8x20xf32> -> vector<8x20xf32>
    %c0_3 = arith.constant 0 : index
    %c0_4 = arith.constant 0 : index
    %3 = vector.load %arg2[%c0_3, %c0_4] : memref<8x4xf32, #tpu.memory_space<vmem>>, vector<8x4xf32>
    %c0_5 = arith.constant 0 : index
    %c0_6 = arith.constant 0 : index
    %4 = vector.load %arg4[%c0_5, %c0_6] : memref<4x20xf32, #tpu.memory_space<vmem>>, vector<4x20xf32>
    %cst_7 = arith.constant dense<0.000000e+00> : vector<8x20xf32>
    %5 = tpu.matmul %3, %4, %cst_7 {dimension_numbers = #tpu.dot_dimension_numbers<[1], [0], [0], [1], [0, 0, 1, 1], [], []>, precision = #tpu.contract_precision<fp32>} : vector<8x4xf32>, vector<4x20xf32>, vector<8x20xf32> -> vector<8x20xf32>
    %6 = arith.addf %2, %5 : vector<8x20xf32>
    %c0_8 = arith.constant 0 : index
    %c0_9 = arith.constant 0 : index
    %7 = vector.load %arg5[%c0_8, %c0_9] : memref<1x20xf32, #tpu.memory_space<vmem>>, vector<1x20xf32>
    %8 = vector.broadcast %7 : vector<1x20xf32> to vector<8x20xf32>
    %9 = arith.addf %6, %8 : vector<8x20xf32>
    %cst_10 = arith.constant 0.000000e+00 : f32
    %10 = vector.broadcast %cst_10 : f32 to vector<8x20xf32>
    %11 = arith.maximumf %9, %10 : vector<8x20xf32>
    %c0_11 = arith.constant 0 : index
    %c0_12 = arith.constant 0 : index
    %12 = vector.load %arg6[%c0_11, %c0_12] : memref<20x20xf32, #tpu.memory_space<vmem>>, vector<20x20xf32>
    %cst_13 = arith.constant dense<0.000000e+00> : vector<8x20xf32>
    %13 = tpu.matmul %11, %12, %cst_13 {dimension_numbers = #tpu.dot_dimension_numbers<[1], [0], [0], [1], [0, 0, 1, 1], [], []>, precision = #tpu.contract_precision<fp32>} : vector<8x20xf32>, vector<20x20xf32>, vector<8x20xf32> -> vector<8x20xf32>
    %c0_14 = arith.constant 0 : index
    %c0_15 = arith.constant 0 : index
    %14 = vector.load %arg7[%c0_14, %c0_15] : memref<1x20xf32, #tpu.memory_space<vmem>>, vector<1x20xf32>
    %15 = vector.broadcast %14 : vector<1x20xf32> to vector<8x20xf32>
    %16 = arith.addf %13, %15 : vector<8x20xf32>
    %cst_16 = arith.constant 0.000000e+00 : f32
    %17 = vector.broadcast %cst_16 : f32 to vector<8x20xf32>
    %18 = arith.maximumf %16, %17 : vector<8x20xf32>
    %c0_17 = arith.constant 0 : index
    %c0_18 = arith.constant 0 : index
    %19 = vector.load %arg8[%c0_17, %c0_18] : memref<20x2xf32, #tpu.memory_space<vmem>>, vector<20x2xf32>
    %cst_19 = arith.constant dense<0.000000e+00> : vector<8x2xf32>
    %20 = tpu.matmul %18, %19, %cst_19 {dimension_numbers = #tpu.dot_dimension_numbers<[1], [0], [0], [1], [0, 0, 1, 1], [], []>, precision = #tpu.contract_precision<fp32>} : vector<8x20xf32>, vector<20x2xf32>, vector<8x2xf32> -> vector<8x2xf32>
    %c0_20 = arith.constant 0 : index
    %c0_21 = arith.constant 0 : index
    %21 = vector.load %arg9[%c0_20, %c0_21] : memref<1x2xf32, #tpu.memory_space<vmem>>, vector<1x2xf32>
    %22 = vector.broadcast %21 : vector<1x2xf32> to vector<8x2xf32>
    %23 = arith.addf %20, %22 : vector<8x2xf32>
    %c0_22 = arith.constant 0 : index
    %c0_23 = arith.constant 0 : index
    %24 = vector.load %arg10[%c0_22, %c0_23] : memref<8x2xf32, #tpu.memory_space<vmem>>, vector<8x2xf32>
    tpu.vector_store %arg10[%c0_22, %c0_23], %23 {strides = array<i32>} : memref<8x2xf32, #tpu.memory_space<vmem>>, vector<8x2xf32>,
    return
  }
  func.func @transform_0(%arg0: i32) -> (i32, i32) {
    %c0_i32 = arith.constant 0 : i32
    %c0_i32_0 = arith.constant 0 : i32
    return %arg0, %c0_i32 : i32, i32
  }
  func.func @transform_1(%arg0: i32) -> (i32, i32) {
    %c0_i32 = arith.constant 0 : i32
    %c0_i32_0 = arith.constant 0 : i32
    return %arg0, %c0_i32 : i32, i32
  }
  func.func @transform_2(%arg0: i32) -> (i32, i32) {
    %c0_i32 = arith.constant 0 : i32
    %c0_i32_0 = arith.constant 0 : i32
    %c0_i32_1 = arith.constant 0 : i32
    return %c0_i32, %c0_i32_0 : i32, i32
  }
  func.func @transform_3(%arg0: i32) -> (i32, i32) {
    %c0_i32 = arith.constant 0 : i32
    %c0_i32_0 = arith.constant 0 : i32
    %c0_i32_1 = arith.constant 0 : i32
    return %c0_i32, %c0_i32_0 : i32, i32
  }
  func.func @transform_4(%arg0: i32) -> (i32, i32) {
    %c0_i32 = arith.constant 0 : i32
    %c0_i32_0 = arith.constant 0 : i32
    %c0_i32_1 = arith.constant 0 : i32
    return %c0_i32, %c0_i32_0 : i32, i32
  }
  func.func @transform_5(%arg0: i32) -> (i32, i32) {
    %c0_i32 = arith.constant 0 : i32
    %c0_i32_0 = arith.constant 0 : i32
    %c0_i32_1 = arith.constant 0 : i32
    return %c0_i32, %c0_i32_0 : i32, i32
  }
  func.func @transform_6(%arg0: i32) -> (i32, i32) {
    %c0_i32 = arith.constant 0 : i32
    %c0_i32_0 = arith.constant 0 : i32
    %c0_i32_1 = arith.constant 0 : i32
    return %c0_i32, %c0_i32_0 : i32, i32
  }
  func.func @transform_7(%arg0: i32) -> (i32, i32) {
    %c0_i32 = arith.constant 0 : i32
    %c0_i32_0 = arith.constant 0 : i32
    %c0_i32_1 = arith.constant 0 : i32
    return %c0_i32, %c0_i32_0 : i32, i32
  }
  func.func @transform_8(%arg0: i32) -> (i32, i32) {
    %c0_i32 = arith.constant 0 : i32
    %c0_i32_0 = arith.constant 0 : i32
    %c0_i32_1 = arith.constant 0 : i32
    return %c0_i32, %c0_i32_0 : i32, i32
  }
  func.func @transform_9(%arg0: i32) -> (i32, i32) {
    %c0_i32 = arith.constant 0 : i32
    %c0_i32_0 = arith.constant 0 : i32
    return %arg0, %c0_i32 : i32, i32
  }
}

</mosaic_0001>

<llo_original>
// kernel: tpu_custom_call.1
$region0: #{tpu_custom_call.1}
  #allocation0 [shape = 'u32[]', space=smem, size = 0x4, offset = 0x4, fixed_abs, tag = 'smem constant byte address 0x4 - core index']
  #allocation1 [shape = 'u32[144,128]{1,0:T(1,128)}', space=vmem, size = 0x12000, scoped, tag = 'internal scratch']
  %s0 = inlined_call_operand.vmem [shape: f32[12,6], index: 0, kind: input, shape index: {}]
  %s1 = inlined_call_operand.vmem [shape: f32[12,4], index: 1, kind: input, shape index: {}]
  %s2 = inlined_call_operand.vmem [shape: f32[6,20], index: 2, kind: input, shape index: {}]
  %s3 = inlined_call_operand.vmem [shape: f32[4,20], index: 3, kind: input, shape index: {}]
  %s4 = inlined_call_operand.vmem [shape: f32[1,20], index: 4, kind: input, shape index: {}]
  %s5 = inlined_call_operand.vmem [shape: f32[20,20], index: 5, kind: input, shape index: {}]
  %s6 = inlined_call_operand.vmem [shape: f32[1,20], index: 6, kind: input, shape index: {}]
  %s7 = inlined_call_operand.vmem [shape: f32[20,2], index: 7, kind: input, shape index: {}]
  %s8 = inlined_call_operand.vmem [shape: f32[1,2], index: 8, kind: input, shape index: {}]
  %s9 = inlined_call_operand.vmem [shape: f32[12,2], index: 9, kind: output, shape index: {}]
  %s10 = sld [smem:[#allocation0]]
  $region69: #{tpu_custom_call.1} parent=0
    _
  %s12 = ssub.s32 1, %s10
  %s13 = scalar_select 0, %s12, %s10
  loop: start=0, step=1, limit=4
  $region2: #{tpu_custom_call.1} parent=0 // loop_pre_header
    _
  $region3: #{tpu_custom_call.1} parent=0 // loop_header
    %s15 = sphi 0, %s19
    %p16 = scmp.ge.s32.totalorder %s15, 4
    %s25 = sphi 0, %s27
    %s28 = sphi 0, %s25
    %s29 = sphi 0, %s28
    %s45 = sphi 0, %s29
    %s51 = sphi 0, %s53
    %s54 = sphi 0, %s51
    %s55 = sphi 0, %s54
    %s71 = sphi 0, %s55
    %s75 = sphi 0, %s75
    %s77 = sphi 0, %s75
    %s78 = sphi 0, %s77
    %s92 = sphi 0, %s78
    %s96 = sphi 0, %s96
    %s98 = sphi 0, %s96
    %s99 = sphi 0, %s98
    %s113 = sphi 0, %s99
    %s117 = sphi 0, %s117
    %s119 = sphi 0, %s117
    %s120 = sphi 0, %s119
    %s134 = sphi 0, %s120
    %s138 = sphi 0, %s138
    %s140 = sphi 0, %s138
    %s141 = sphi 0, %s140
    %s155 = sphi 0, %s141
    %s159 = sphi 0, %s159
    %s161 = sphi 0, %s159
    %s162 = sphi 0, %s161
    %s176 = sphi 0, %s162
    %s180 = sphi 0, %s180
    %s182 = sphi 0, %s180
    %s183 = sphi 0, %s182
    %s197 = sphi 0, %s183
    %s201 = sphi 0, %s201
    %s203 = sphi 0, %s201
    %s204 = sphi 0, %s203
    %s218 = sphi 0, %s204
    %s224 = sphi 0, %s226
    %s227 = sphi 0, %s224
    %s228 = sphi 0, %s227
    %s244 = sphi 0, %s228
  $region4: #{tpu_custom_call.1} parent=0 // loop_header_branch
    %18 = sbr.rel (%p16) target = $region8
  $region5: #{tpu_custom_call.1} parent=0 // loop_body
    %s20 = ssub.s32 %s15, 1
    %s21 = ssub.s32 %s15, 2
    %s22 = sadd.s32 %s15, 1
    %s23 = ssub.s32 %s15, %s22
    %p24 = scmp.eq.s32.totalorder %s23, 0
    %s26 = sadd.s32 %s25, 1
    %s27 = scalar_select %p24, %s25, %s26
    %p30 = pneg %p24
    %p31 = scmp.eq.s32.totalorder %s15, 1
    %p32 = por %p30, %p31
    %p33 = scmp.ne.s32.totalorder %s25, %s28
    %p34 = scmp.eq.s32.totalorder %s15, 0
    %p35 = por %p33, %p34
    %p36 = scmp.ne.s32.totalorder %s25, %s28
    %p37 = scmp.eq.s32.totalorder %s20, 1
    %p38 = por %p36, %p37
    %p39 = scmp.ne.s32.totalorder %s28, %s29
    %p40 = scmp.eq.s32.totalorder %s20, 0
    %p41 = por %p39, %p40
    %p42 = scmp.ne.s32.totalorder %s28, %s29
    %p43 = scmp.eq.s32.totalorder %s21, 1
    %p44 = por %p42, %p43
    %p46 = scmp.ne.s32.totalorder %s29, %s45
    %p47 = scmp.eq.s32.totalorder %s21, 0
    %p48 = por %p46, %p47
    %s49 = ssub.s32 %s15, %s22
    %p50 = scmp.eq.s32.totalorder %s49, 0
    %s52 = sadd.s32 %s51, 1
    %s53 = scalar_select %p50, %s51, %s52
    %p56 = pneg %p50
    %p57 = scmp.eq.s32.totalorder %s15, 1
    %p58 = por %p56, %p57
    %p59 = scmp.ne.s32.totalorder %s51, %s54
    %p60 = scmp.eq.s32.totalorder %s15, 0
    %p61 = por %p59, %p60
    %p62 = scmp.ne.s32.totalorder %s51, %s54
    %p63 = scmp.eq.s32.totalorder %s20, 1
    %p64 = por %p62, %p63
    %p65 = scmp.ne.s32.totalorder %s54, %s55
    %p66 = scmp.eq.s32.totalorder %s20, 0
    %p67 = por %p65, %p66
    %p68 = scmp.ne.s32.totalorder %s54, %s55
    %p69 = scmp.eq.s32.totalorder %s21, 1
    %p70 = por %p68, %p69
    %p72 = scmp.ne.s32.totalorder %s55, %s71
    %p73 = scmp.eq.s32.totalorder %s21, 0
    %p74 = por %p72, %p73
    %s76 = sadd.s32 %s75, 1
    %p79 = scmp.eq.s32.totalorder %s15, 1
    %p80 = scmp.ne.s32.totalorder %s75, %s77
    %p81 = scmp.eq.s32.totalorder %s15, 0
    %p82 = por %p80, %p81
    %p83 = scmp.ne.s32.totalorder %s75, %s77
    %p84 = scmp.eq.s32.totalorder %s20, 1
    %p85 = por %p83, %p84
    %p86 = scmp.ne.s32.totalorder %s77, %s78
    %p87 = scmp.eq.s32.totalorder %s20, 0
    %p88 = por %p86, %p87
    %p89 = scmp.ne.s32.totalorder %s77, %s78
    %p90 = scmp.eq.s32.totalorder %s21, 1
    %p91 = por %p89, %p90
    %p93 = scmp.ne.s32.totalorder %s78, %s92
    %p94 = scmp.eq.s32.totalorder %s21, 0
    %p95 = por %p93, %p94
    %s97 = sadd.s32 %s96, 1
    %p100 = scmp.eq.s32.totalorder %s15, 1
    %p101 = scmp.ne.s32.totalorder %s96, %s98
    %p102 = scmp.eq.s32.totalorder %s15, 0
    %p103 = por %p101, %p102
    %p104 = scmp.ne.s32.totalorder %s96, %s98
    %p105 = scmp.eq.s32.totalorder %s20, 1
    %p106 = por %p104, %p105
    %p107 = scmp.ne.s32.totalorder %s98, %s99
    %p108 = scmp.eq.s32.totalorder %s20, 0
    %p109 = por %p107, %p108
    %p110 = scmp.ne.s32.totalorder %s98, %s99
    %p111 = scmp.eq.s32.totalorder %s21, 1
    %p112 = por %p110, %p111
    %p114 = scmp.ne.s32.totalorder %s99, %s113
    %p115 = scmp.eq.s32.totalorder %s21, 0
    %p116 = por %p114, %p115
    %s118 = sadd.s32 %s117, 1
    %p121 = scmp.eq.s32.totalorder %s15, 1
    %p122 = scmp.ne.s32.totalorder %s117, %s119
    %p123 = scmp.eq.s32.totalorder %s15, 0
    %p124 = por %p122, %p123
    %p125 = scmp.ne.s32.totalorder %s117, %s119
    %p126 = scmp.eq.s32.totalorder %s20, 1
    %p127 = por %p125, %p126
    %p128 = scmp.ne.s32.totalorder %s119, %s120
    %p129 = scmp.eq.s32.totalorder %s20, 0
    %p130 = por %p128, %p129
    %p131 = scmp.ne.s32.totalorder %s119, %s120
    %p132 = scmp.eq.s32.totalorder %s21, 1
    %p133 = por %p131, %p132
    %p135 = scmp.ne.s32.totalorder %s120, %s134
    %p136 = scmp.eq.s32.totalorder %s21, 0
    %p137 = por %p135, %p136
    %s139 = sadd.s32 %s138, 1
    %p142 = scmp.eq.s32.totalorder %s15, 1
    %p143 = scmp.ne.s32.totalorder %s138, %s140
    %p144 = scmp.eq.s32.totalorder %s15, 0
    %p145 = por %p143, %p144
    %p146 = scmp.ne.s32.totalorder %s138, %s140
    %p147 = scmp.eq.s32.totalorder %s20, 1
    %p148 = por %p146, %p147
    %p149 = scmp.ne.s32.totalorder %s140, %s141
    %p150 = scmp.eq.s32.totalorder %s20, 0
    %p151 = por %p149, %p150
    %p152 = scmp.ne.s32.totalorder %s140, %s141
    %p153 = scmp.eq.s32.totalorder %s21, 1
    %p154 = por %p152, %p153
    %p156 = scmp.ne.s32.totalorder %s141, %s155
    %p157 = scmp.eq.s32.totalorder %s21, 0
    %p158 = por %p156, %p157
    %s160 = sadd.s32 %s159, 1
    %p163 = scmp.eq.s32.totalorder %s15, 1
    %p164 = scmp.ne.s32.totalorder %s159, %s161
    %p165 = scmp.eq.s32.totalorder %s15, 0
    %p166 = por %p164, %p165
    %p167 = scmp.ne.s32.totalorder %s159, %s161
    %p168 = scmp.eq.s32.totalorder %s20, 1
    %p169 = por %p167, %p168
    %p170 = scmp.ne.s32.totalorder %s161, %s162
    %p171 = scmp.eq.s32.totalorder %s20, 0
    %p172 = por %p170, %p171
    %p173 = scmp.ne.s32.totalorder %s161, %s162
    %p174 = scmp.eq.s32.totalorder %s21, 1
    %p175 = por %p173, %p174
    %p177 = scmp.ne.s32.totalorder %s162, %s176
    %p178 = scmp.eq.s32.totalorder %s21, 0
    %p179 = por %p177, %p178
    %s181 = sadd.s32 %s180, 1
    %p184 = scmp.eq.s32.totalorder %s15, 1
    %p185 = scmp.ne.s32.totalorder %s180, %s182
    %p186 = scmp.eq.s32.totalorder %s15, 0
    %p187 = por %p185, %p186
    %p188 = scmp.ne.s32.totalorder %s180, %s182
    %p189 = scmp.eq.s32.totalorder %s20, 1
    %p190 = por %p188, %p189
    %p191 = scmp.ne.s32.totalorder %s182, %s183
    %p192 = scmp.eq.s32.totalorder %s20, 0
    %p193 = por %p191, %p192
    %p194 = scmp.ne.s32.totalorder %s182, %s183
    %p195 = scmp.eq.s32.totalorder %s21, 1
    %p196 = por %p194, %p195
    %p198 = scmp.ne.s32.totalorder %s183, %s197
    %p199 = scmp.eq.s32.totalorder %s21, 0
    %p200 = por %p198, %p199
    %s202 = sadd.s32 %s201, 1
    %p205 = scmp.eq.s32.totalorder %s15, 1
    %p206 = scmp.ne.s32.totalorder %s201, %s203
    %p207 = scmp.eq.s32.totalorder %s15, 0
    %p208 = por %p206, %p207
    %p209 = scmp.ne.s32.totalorder %s201, %s203
    %p210 = scmp.eq.s32.totalorder %s20, 1
    %p211 = por %p209, %p210
    %p212 = scmp.ne.s32.totalorder %s203, %s204
    %p213 = scmp.eq.s32.totalorder %s20, 0
    %p214 = por %p212, %p213
    %p215 = scmp.ne.s32.totalorder %s203, %s204
    %p216 = scmp.eq.s32.totalorder %s21, 1
    %p217 = por %p215, %p216
    %p219 = scmp.ne.s32.totalorder %s204, %s218
    %p220 = scmp.eq.s32.totalorder %s21, 0
    %p221 = por %p219, %p220
    %s222 = ssub.s32 %s15, %s22
    %p223 = scmp.eq.s32.totalorder %s222, 0
    %s225 = sadd.s32 %s224, 1
    %s226 = scalar_select %p223, %s224, %s225
    %p229 = pneg %p223
    %p230 = scmp.eq.s32.totalorder %s15, 1
    %p231 = por %p229, %p230
    %p232 = scmp.ne.s32.totalorder %s224, %s227
    %p233 = scmp.eq.s32.totalorder %s15, 0
    %p234 = por %p232, %p233
    %p235 = scmp.ne.s32.totalorder %s224, %s227
    %p236 = scmp.eq.s32.totalorder %s20, 1
    %p237 = por %p235, %p236
    %p238 = scmp.ne.s32.totalorder %s227, %s228
    %p239 = scmp.eq.s32.totalorder %s20, 0
    %p240 = por %p238, %p239
    %p241 = scmp.ne.s32.totalorder %s227, %s228
    %p242 = scmp.eq.s32.totalorder %s21, 1
    %p243 = por %p241, %p242
    %p245 = scmp.ne.s32.totalorder %s228, %s244
    %p246 = scmp.eq.s32.totalorder %s21, 0
    %p247 = por %p245, %p246
    %p248 = scmp.le.s32.totalorder 1, %s15
    %p249 = scmp.lt.s32.totalorder %s15, 3
    %p250 = pnand %p248, %p249
    %p251 = pneg %p250
    // Predicated region
    $region9: #{tpu_custom_call.1} parent=5 // pred_check
      _
    $region10: #{tpu_custom_call.1} parent=5 // pred_check_branch
      %253 = sbr.rel (%p250) target = $region12
    $region11: #{tpu_custom_call.1} parent=5 // pred_region
      %s254 = ssub.s32 %s15, 1
      // Predicated region
      $region13: #{tpu_custom_call.1} parent=11 // pred_check
        %p255 = pneg %p88
      $region14: #{tpu_custom_call.1} parent=11 // pred_check_branch
        %257 = sbr.rel (%p255) target = $region16
      $region15: #{tpu_custom_call.1} parent=11 // pred_region
        _
      $region16: #{tpu_custom_call.1} parent=11 // pred_fallthru
        _
      // Predicated region
      $region17: #{tpu_custom_call.1} parent=11 // pred_check
        %p258 = pneg %p109
      $region18: #{tpu_custom_call.1} parent=11 // pred_check_branch
        %260 = sbr.rel (%p258) target = $region20
      $region19: #{tpu_custom_call.1} parent=11 // pred_region
        _
      $region20: #{tpu_custom_call.1} parent=11 // pred_fallthru
        _
      // Predicated region
      $region21: #{tpu_custom_call.1} parent=11 // pred_check
        %p261 = pneg %p130
      $region22: #{tpu_custom_call.1} parent=11 // pred_check_branch
        %263 = sbr.rel (%p261) target = $region24
      $region23: #{tpu_custom_call.1} parent=11 // pred_region
        _
      $region24: #{tpu_custom_call.1} parent=11 // pred_fallthru
        _
      // Predicated region
      $region25: #{tpu_custom_call.1} parent=11 // pred_check
        %p264 = pneg %p151
      $region26: #{tpu_custom_call.1} parent=11 // pred_check_branch
        %266 = sbr.rel (%p264) target = $region28
      $region27: #{tpu_custom_call.1} parent=11 // pred_region
        _
      $region28: #{tpu_custom_call.1} parent=11 // pred_fallthru
        _
      // Predicated region
      $region29: #{tpu_custom_call.1} parent=11 // pred_check
        %p267 = pneg %p172
      $region30: #{tpu_custom_call.1} parent=11 // pred_check_branch
        %269 = sbr.rel (%p267) target = $region32
      $region31: #{tpu_custom_call.1} parent=11 // pred_region
        _
      $region32: #{tpu_custom_call.1} parent=11 // pred_fallthru
        _
      // Predicated region
      $region33: #{tpu_custom_call.1} parent=11 // pred_check
        %p270 = pneg %p193
      $region34: #{tpu_custom_call.1} parent=11 // pred_check_branch
        %272 = sbr.rel (%p270) target = $region36
      $region35: #{tpu_custom_call.1} parent=11 // pred_region
        _
      $region36: #{tpu_custom_call.1} parent=11 // pred_fallthru
        _
      // Predicated region
      $region37: #{tpu_custom_call.1} parent=11 // pred_check
        %p273 = pneg %p214
      $region38: #{tpu_custom_call.1} parent=11 // pred_check_branch
        %275 = sbr.rel (%p273) target = $region40
      $region39: #{tpu_custom_call.1} parent=11 // pred_region
        _
      $region40: #{tpu_custom_call.1} parent=11 // pred_fallthru
        _
    $region12: #{tpu_custom_call.1} parent=5 // pred_fallthru
      _
    %p276 = scmp.lt.s32.totalorder %s15, 2
    // Predicated region
    $region41: #{tpu_custom_call.1} parent=5 // pred_check
      %p277 = pneg %p276
    $region42: #{tpu_custom_call.1} parent=5 // pred_check_branch
      %279 = sbr.rel (%p277) target = $region44
    $region43: #{tpu_custom_call.1} parent=5 // pred_region
      // Predicated region
      $region45: #{tpu_custom_call.1} parent=43 // pred_check
        %p280 = pneg %p35
      $region46: #{tpu_custom_call.1} parent=43 // pred_check_branch
        %282 = sbr.rel (%p280) target = $region48
      $region47: #{tpu_custom_call.1} parent=43 // pred_region
        %p283 = scmp.lt.s32.totalorder %s15, 1
        %s284 = scalar_select %p283, %s15, 1
        %s285 = smul.addr %s284, 8
        %s286 = scalar_lea.vmem %s0, %s285
      $region48: #{tpu_custom_call.1} parent=43 // pred_fallthru
        _
      // Predicated region
      $region49: #{tpu_custom_call.1} parent=43 // pred_check
        %p287 = pneg %p61
      $region50: #{tpu_custom_call.1} parent=43 // pred_check_branch
        %289 = sbr.rel (%p287) target = $region52
      $region51: #{tpu_custom_call.1} parent=43 // pred_region
        %p290 = scmp.lt.s32.totalorder %s15, 1
        %s291 = scalar_select %p290, %s15, 1
        %s292 = smul.addr %s291, 8
        %s293 = scalar_lea.vmem %s1, %s292
      $region52: #{tpu_custom_call.1} parent=43 // pred_fallthru
        _
    $region44: #{tpu_custom_call.1} parent=5 // pred_fallthru
      _
    %p294 = scmp.le.s32.totalorder 1, %s15
    %p295 = scmp.lt.s32.totalorder %s15, 3
    %p296 = pnand %p294, %p295
    %p297 = pneg %p296
    // Predicated region
    $region53: #{tpu_custom_call.1} parent=5 // pred_check
      _
    $region54: #{tpu_custom_call.1} parent=5 // pred_check_branch
      %299 = sbr.rel (%p296) target = $region56
    $region55: #{tpu_custom_call.1} parent=5 // pred_region
      %s300 = ssub.s32 %s15, 1
      %p301 = scmp.lt.s32.totalorder %s20, 1
      %s302 = scalar_select %p301, %s20, 1
      %s303 = smul.addr %s302, 8
      %s304 = scalar_lea.vmem %s0, %s303
      %p305 = pneg %p41
      %p306 = pneg %p38
      %p307 = scmp.lt.s32.totalorder %s20, 1
      %s308 = scalar_select %p307, %s20, 1
      %s309 = smul.addr %s308, 8
      %s310 = scalar_lea.vmem %s1, %s309
      %p311 = pneg %p67
      %p312 = pneg %p64
      %p313 = pneg %p88
      %p314 = pneg %p85
      %p315 = pneg %p109
      %p316 = pneg %p106
      %p317 = pneg %p130
      %p318 = pneg %p127
      %p319 = pneg %p151
      %p320 = pneg %p148
      %p321 = pneg %p172
      %p322 = pneg %p169
      %p323 = pneg %p193
      %p324 = pneg %p190
      %p325 = pneg %p214
      %p326 = pneg %p211
      %p327 = pneg %p240
      %p328 = pneg %p237
      %p329 = scmp.lt.s32.totalorder %s20, 1
      %s330 = scalar_select %p329, %s20, 1
      %s331 = smul.addr %s330, 8
      %s332 = scalar_lea.vmem %s9, %s331
      %p333 = scmp.lt.s32.totalorder %s20, 1
      %s334 = scalar_select %p333, %s20, 1
      %s335 = smul.addr %s334, 8
      %s336 = scalar_lea.vmem %s0, %s335
      %p337 = scmp.lt.s32.totalorder %s20, 1
      %s338 = scalar_select %p337, %s20, 1
      %s339 = smul.addr %s338, 8
      %s340 = scalar_lea.vmem %s1, %s339
      %p341 = scmp.lt.s32.totalorder %s20, 1
      %s342 = scalar_select %p341, %s20, 1
      %s343 = smul.addr %s342, 8
      %s344 = scalar_lea.vmem %s9, %s343
      %v345 = vld [vmem:[%s336] sm:$0xff]
      %v346 = vld [vmem:[%s2] sm:$0x3f]
      %v347 = vld [vmem:[%s340] sm:$0xff]
      %v348 = vld [vmem:[%s3] sm:$0xf]
      %vm349 = vcmask 31744
      %v351 = vsel %vm349, %v347, 0
      %vm353 = vcmask 1043456
      %v355 = vsel %vm353, %v348, 0
      %357 = vmatprep.subr.mxu0 0.0
      %v358 = vand.u32 %v355, 4294901760
      %359 = vmatpush1.msra.mxu0 %v358
      %360 = vmatprep.subr.mxu0 0.0
      %361 = vmatpush1.msra.mxu0 0.0
      %362 = vmatprep.subr.mxu0 0.0
      %363 = vmatpush1.msra.mxu0 0.0
      %364 = vmatprep.subr.mxu0 0.0
      %365 = vmatpush1.msra.mxu0 0.0
      %366 = vmatprep.subr.mxu0 0.0
      %367 = vmatpush1.msra.mxu0 0.0
      %368 = vmatprep.subr.mxu0 0.0
      %369 = vmatpush1.msra.mxu0 0.0
      %370 = vmatprep.subr.mxu0 0.0
      %371 = vmatpush1.msra.mxu0 0.0
      %372 = vmatprep.subr.mxu0 0.0
      %373 = vmatpush1.msra.mxu0 0.0
      %374 = vmatprep.subr.mxu0 0.0
      %375 = vmatpush1.msra.mxu0 0.0
      %376 = vmatprep.subr.mxu0 0.0
      %377 = vmatpush1.msra.mxu0 0.0
      %378 = vmatprep.subr.mxu0 0.0
      %379 = vmatpush1.msra.mxu0 0.0
      %380 = vmatprep.subr.mxu0 0.0
      %381 = vmatpush1.msra.mxu0 0.0
      %382 = vmatprep.subr.mxu0 0.0
      %383 = vmatpush1.msra.mxu0 0.0
      %384 = vmatprep.subr.mxu0 0.0
      %385 = vmatpush1.msra.mxu0 0.0
      %386 = vmatprep.subr.mxu0 0.0
      %387 = vmatpush1.msra.mxu0 0.0
      %388 = vmatprep.subr.mxu0 0.0
      %389 = vmatpush1.msra.mxu0 0.0
      %390 = vmatprep.subr.mxu0 0.0
      %391 = vmatpush1.msra.mxu0 0.0
      %392 = vmatprep.subr.mxu0 0.0
      %393 = vmatpush1.msra.mxu0 0.0
      %394 = vmatprep.subr.mxu0 0.0
      %395 = vmatpush1.msra.mxu0 0.0
      %396 = vmatprep.subr.mxu0 0.0
      %397 = vmatpush1.msra.mxu0 0.0
      %398 = vmatprep.subr.mxu0 0.0
      %399 = vmatpush1.msra.mxu0 0.0
      %400 = vmatprep.subr.mxu0 0.0
      %401 = vmatpush1.msra.mxu0 0.0
      %402 = vmatprep.subr.mxu0 0.0
      %403 = vmatpush1.msra.mxu0 0.0
      %404 = vmatprep.subr.mxu0 0.0
      %405 = vmatpush1.msra.mxu0 0.0
      %406 = vmatprep.subr.mxu0 0.0
      %407 = vmatpush1.msra.mxu0 0.0
      %408 = vmatprep.subr.mxu0 0.0
      %409 = vmatpush1.msra.mxu0 0.0
      %410 = vmatprep.subr.mxu0 0.0
      %411 = vmatpush1.msra.mxu0 0.0
      %412 = vmatprep.subr.mxu0 0.0
      %413 = vmatpush1.msra.mxu0 0.0
      %414 = vmatprep.subr.mxu0 0.0
      %415 = vmatpush1.msra.mxu0 0.0
      %416 = vmatprep.subr.mxu0 0.0
      %417 = vmatpush1.msra.mxu0 0.0
      %418 = vmatprep.subr.mxu0 0.0
      %419 = vmatpush1.msra.mxu0 0.0
      %420 = vmatprep.subr.mxu0 0.0
      %421 = vmatpush1.msra.mxu0 0.0
      %422 = vmatprep.mubr.f32.mxu0 0.0
      %v423 = vand.u32 %v351, 4294901760
      %v424 = vsub.f32 %v351, %v423
      %v425 = vand.u32 %v424, 4294901760
      %v426 = vsub.f32 %v424, %v425
      %v427 = vand.u32 %v426, 4294901760
      %428 = vmatmul.mubr.f32.gmra.mrb[0].mxu0 %v427
      %v429 = vpop.f32.mrb[0].mxu0
      %v430 = vadd.f32 0.0, %v429
      %v431 = vpop.f32.mrb[0].mxu0
      %432 = vdwg.mxu0
      %433 = vmatprep.subr.mxu0 0.0
      %v434 = vand.u32 %v355, 4294901760
      %v435 = vsub.f32 %v355, %v434
      %v436 = vand.u32 %v435, 4294901760
      %v437 = vsub.f32 %v435, %v436
      %v438 = vand.u32 %v437, 4294901760
      %439 = vmatpush1.msra.mxu0 %v438
      %440 = vmatprep.subr.mxu0 0.0
      %441 = vmatpush1.msra.mxu0 0.0
      %442 = vmatprep.subr.mxu0 0.0
      %443 = vmatpush1.msra.mxu0 0.0
      %444 = vmatprep.subr.mxu0 0.0
      %445 = vmatpush1.msra.mxu0 0.0
      %446 = vmatprep.subr.mxu0 0.0
      %447 = vmatpush1.msra.mxu0 0.0
      %448 = vmatprep.subr.mxu0 0.0
      %449 = vmatpush1.msra.mxu0 0.0
      %450 = vmatprep.subr.mxu0 0.0
      %451 = vmatpush1.msra.mxu0 0.0
      %452 = vmatprep.subr.mxu0 0.0
      %453 = vmatpush1.msra.mxu0 0.0
      %454 = vmatprep.subr.mxu0 0.0
      %455 = vmatpush1.msra.mxu0 0.0
      %456 = vmatprep.subr.mxu0 0.0
      %457 = vmatpush1.msra.mxu0 0.0
      %458 = vmatprep.subr.mxu0 0.0
      %459 = vmatpush1.msra.mxu0 0.0
      %460 = vmatprep.subr.mxu0 0.0
      %461 = vmatpush1.msra.mxu0 0.0
      %462 = vmatprep.subr.mxu0 0.0
      %463 = vmatpush1.msra.mxu0 0.0
      %464 = vmatprep.subr.mxu0 0.0
      %465 = vmatpush1.msra.mxu0 0.0
      %466 = vmatprep.subr.mxu0 0.0
      %467 = vmatpush1.msra.mxu0 0.0
      %468 = vmatprep.subr.mxu0 0.0
      %469 = vmatpush1.msra.mxu0 0.0
      %470 = vmatprep.subr.mxu0 0.0
      %471 = vmatpush1.msra.mxu0 0.0
      %472 = vmatprep.subr.mxu0 0.0
      %473 = vmatpush1.msra.mxu0 0.0
      %474 = vmatprep.subr.mxu0 0.0
      %475 = vmatpush1.msra.mxu0 0.0
      %476 = vmatprep.subr.mxu0 0.0
      %477 = vmatpush1.msra.mxu0 0.0
      %478 = vmatprep.subr.mxu0 0.0
      %479 = vmatpush1.msra.mxu0 0.0
      %480 = vmatprep.subr.mxu0 0.0
      %481 = vmatpush1.msra.mxu0 0.0
      %482 = vmatprep.subr.mxu0 0.0
      %483 = vmatpush1.msra.mxu0 0.0
      %484 = vmatprep.subr.mxu0 0.0
      %485 = vmatpush1.msra.mxu0 0.0
      %486 = vmatprep.subr.mxu0 0.0
      %487 = vmatpush1.msra.mxu0 0.0
      %488 = vmatprep.subr.mxu0 0.0
      %489 = vmatpush1.msra.mxu0 0.0
      %490 = vmatprep.subr.mxu0 0.0
      %491 = vmatpush1.msra.mxu0 0.0
      %492 = vmatprep.subr.mxu0 0.0
      %493 = vmatpush1.msra.mxu0 0.0
      %494 = vmatprep.subr.mxu0 0.0
      %495 = vmatpush1.msra.mxu0 0.0
      %496 = vmatprep.subr.mxu0 0.0
      %497 = vmatpush1.msra.mxu0 0.0
      %498 = vmatprep.subr.mxu0 0.0
      %499 = vmatpush1.msra.mxu0 0.0
      %500 = vmatprep.subr.mxu0 0.0
      %501 = vmatpush1.msra.mxu0 0.0
      %502 = vmatprep.mubr.f32.mxu0 0.0
      %v503 = vand.u32 %v351, 4294901760
      %504 = vmatmul.mubr.f32.gmra.mrb[0].mxu0 %v503
      %v505 = vpop.f32.mrb[0].mxu0
      %v506 = vadd.f32 %v430, %v505
      %v507 = vpop.f32.mrb[0].mxu0
      %508 = vdwg.mxu0
      %509 = vmatprep.subr.mxu0 0.0
      %v510 = vand.u32 %v355, 4294901760
      %v511 = vsub.f32 %v355, %v510
      %512 = vmatpush1.msra.mxu0 %v511
      %513 = vmatprep.subr.mxu0 0.0
      %514 = vmatpush1.msra.mxu0 0.0
      %515 = vmatprep.subr.mxu0 0.0
      %516 = vmatpush1.msra.mxu0 0.0
      %517 = vmatprep.subr.mxu0 0.0
      %518 = vmatpush1.msra.mxu0 0.0
      %519 = vmatprep.subr.mxu0 0.0
      %520 = vmatpush1.msra.mxu0 0.0
      %521 = vmatprep.subr.mxu0 0.0
      %522 = vmatpush1.msra.mxu0 0.0
      %523 = vmatprep.subr.mxu0 0.0
      %524 = vmatpush1.msra.mxu0 0.0
      %525 = vmatprep.subr.mxu0 0.0
      %526 = vmatpush1.msra.mxu0 0.0
      %527 = vmatprep.subr.mxu0 0.0
      %528 = vmatpush1.msra.mxu0 0.0
      %529 = vmatprep.subr.mxu0 0.0
      %530 = vmatpush1.msra.mxu0 0.0
      %531 = vmatprep.subr.mxu0 0.0
      %532 = vmatpush1.msra.mxu0 0.0
      %533 = vmatprep.subr.mxu0 0.0
      %534 = vmatpush1.msra.mxu0 0.0
      %535 = vmatprep.subr.mxu0 0.0
      %536 = vmatpush1.msra.mxu0 0.0
      %537 = vmatprep.subr.mxu0 0.0
      %538 = vmatpush1.msra.mxu0 0.0
      %539 = vmatprep.subr.mxu0 0.0
      %540 = vmatpush1.msra.mxu0 0.0
      %541 = vmatprep.subr.mxu0 0.0
      %542 = vmatpush1.msra.mxu0 0.0
      %543 = vmatprep.subr.mxu0 0.0
      %544 = vmatpush1.msra.mxu0 0.0
      %545 = vmatprep.subr.mxu0 0.0
      %546 = vmatpush1.msra.mxu0 0.0
      %547 = vmatprep.subr.mxu0 0.0
      %548 = vmatpush1.msra.mxu0 0.0
      %549 = vmatprep.subr.mxu0 0.0
      %550 = vmatpush1.msra.mxu0 0.0
      %551 = vmatprep.subr.mxu0 0.0
      %552 = vmatpush1.msra.mxu0 0.0
      %553 = vmatprep.subr.mxu0 0.0
      %554 = vmatpush1.msra.mxu0 0.0
      %555 = vmatprep.subr.mxu0 0.0
      %556 = vmatpush1.msra.mxu0 0.0
      %557 = vmatprep.subr.mxu0 0.0
      %558 = vmatpush1.msra.mxu0 0.0
      %559 = vmatprep.subr.mxu0 0.0
      %560 = vmatpush1.msra.mxu0 0.0
      %561 = vmatprep.subr.mxu0 0.0
      %562 = vmatpush1.msra.mxu0 0.0
      %563 = vmatprep.subr.mxu0 0.0
      %564 = vmatpush1.msra.mxu0 0.0
      %565 = vmatprep.subr.mxu0 0.0
      %566 = vmatpush1.msra.mxu0 0.0
      %567 = vmatprep.subr.mxu0 0.0
      %568 = vmatpush1.msra.mxu0 0.0
      %569 = vmatprep.subr.mxu0 0.0
      %570 = vmatpush1.msra.mxu0 0.0
      %571 = vmatprep.subr.mxu0 0.0
      %572 = vmatpush1.msra.mxu0 0.0
      %573 = vmatprep.subr.mxu0 0.0
      %574 = vmatpush1.msra.mxu0 0.0
      %575 = vmatprep.mubr.f32.mxu0 0.0
      %v576 = vand.u32 %v351, 4294901760
      %v577 = vsub.f32 %v351, %v576
      %578 = vmatmul.mubr.f32.gmra.mrb[0].mxu0 %v577
      %v579 = vpop.f32.mrb[0].mxu0
      %v580 = vadd.f32 %v506, %v579
      %v581 = vpop.f32.mrb[0].mxu0
      %582 = vdwg.mxu0
      %583 = vmatprep.subr.mxu0 0.0
      %v584 = vand.u32 %v355, 4294901760
      %585 = vmatpush1.msra.mxu0 %v584
      %586 = vmatprep.subr.mxu0 0.0
      %587 = vmatpush1.msra.mxu0 0.0
      %588 = vmatprep.subr.mxu0 0.0
      %589 = vmatpush1.msra.mxu0 0.0
      %590 = vmatprep.subr.mxu0 0.0
      %591 = vmatpush1.msra.mxu0 0.0
      %592 = vmatprep.subr.mxu0 0.0
      %593 = vmatpush1.msra.mxu0 0.0
      %594 = vmatprep.subr.mxu0 0.0
      %595 = vmatpush1.msra.mxu0 0.0
      %596 = vmatprep.subr.mxu0 0.0
      %597 = vmatpush1.msra.mxu0 0.0
      %598 = vmatprep.subr.mxu0 0.0
      %599 = vmatpush1.msra.mxu0 0.0
      %600 = vmatprep.subr.mxu0 0.0
      %601 = vmatpush1.msra.mxu0 0.0
      %602 = vmatprep.subr.mxu0 0.0
      %603 = vmatpush1.msra.mxu0 0.0
      %604 = vmatprep.subr.mxu0 0.0
      %605 = vmatpush1.msra.mxu0 0.0
      %606 = vmatprep.subr.mxu0 0.0
      %607 = vmatpush1.msra.mxu0 0.0
      %608 = vmatprep.subr.mxu0 0.0
      %609 = vmatpush1.msra.mxu0 0.0
      %610 = vmatprep.subr.mxu0 0.0
      %611 = vmatpush1.msra.mxu0 0.0
      %612 = vmatprep.subr.mxu0 0.0
      %613 = vmatpush1.msra.mxu0 0.0
      %614 = vmatprep.subr.mxu0 0.0
      %615 = vmatpush1.msra.mxu0 0.0
      %616 = vmatprep.subr.mxu0 0.0
      %617 = vmatpush1.msra.mxu0 0.0
      %618 = vmatprep.subr.mxu0 0.0
      %619 = vmatpush1.msra.mxu0 0.0
      %620 = vmatprep.subr.mxu0 0.0
      %621 = vmatpush1.msra.mxu0 0.0
      %622 = vmatprep.subr.mxu0 0.0
      %623 = vmatpush1.msra.mxu0 0.0
      %624 = vmatprep.subr.mxu0 0.0
      %625 = vmatpush1.msra.mxu0 0.0
      %626 = vmatprep.subr.mxu0 0.0
      %627 = vmatpush1.msra.mxu0 0.0
      %628 = vmatprep.subr.mxu0 0.0
      %629 = vmatpush1.msra.mxu0 0.0
      %630 = vmatprep.subr.mxu0 0.0
      %631 = vmatpush1.msra.mxu0 0.0
      %632 = vmatprep.subr.mxu0 0.0
      %633 = vmatpush1.msra.mxu0 0.0
      %634 = vmatprep.subr.mxu0 0.0
      %635 = vmatpush1.msra.mxu0 0.0
      %636 = vmatprep.subr.mxu0 0.0
      %637 = vmatpush1.msra.mxu0 0.0
      %638 = vmatprep.subr.mxu0 0.0
      %639 = vmatpush1.msra.mxu0 0.0
      %640 = vmatprep.subr.mxu0 0.0
      %641 = vmatpush1.msra.mxu0 0.0
      %642 = vmatprep.subr.mxu0 0.0
      %643 = vmatpush1.msra.mxu0 0.0
      %644 = vmatprep.subr.mxu0 0.0
      %645 = vmatpush1.msra.mxu0 0.0
      %646 = vmatprep.subr.mxu0 0.0
      %647 = vmatpush1.msra.mxu0 0.0
      %648 = vmatprep.mubr.f32.mxu0 0.0
      %v649 = vand.u32 %v351, 4294901760
      %v650 = vsub.f32 %v351, %v649
      %v651 = vand.u32 %v650, 4294901760
      %652 = vmatmul.mubr.f32.gmra.mrb[0].mxu0 %v651
      %v653 = vpop.f32.mrb[0].mxu0
      %v654 = vadd.f32 %v580, %v653
      %v655 = vpop.f32.mrb[0].mxu0
      %656 = vdwg.mxu0
      %657 = vmatprep.subr.mxu0 0.0
      %v658 = vand.u32 %v355, 4294901760
      %v659 = vsub.f32 %v355, %v658
      %v660 = vand.u32 %v659, 4294901760
      %661 = vmatpush1.msra.mxu0 %v660
      %662 = vmatprep.subr.mxu0 0.0
      %663 = vmatpush1.msra.mxu0 0.0
      %664 = vmatprep.subr.mxu0 0.0
      %665 = vmatpush1.msra.mxu0 0.0
      %666 = vmatprep.subr.mxu0 0.0
      %667 = vmatpush1.msra.mxu0 0.0
      %668 = vmatprep.subr.mxu0 0.0
      %669 = vmatpush1.msra.mxu0 0.0
      %670 = vmatprep.subr.mxu0 0.0
      %671 = vmatpush1.msra.mxu0 0.0
      %672 = vmatprep.subr.mxu0 0.0
      %673 = vmatpush1.msra.mxu0 0.0
      %674 = vmatprep.subr.mxu0 0.0
      %675 = vmatpush1.msra.mxu0 0.0
      %676 = vmatprep.subr.mxu0 0.0
      %677 = vmatpush1.msra.mxu0 0.0
      %678 = vmatprep.subr.mxu0 0.0
      %679 = vmatpush1.msra.mxu0 0.0
      %680 = vmatprep.subr.mxu0 0.0
      %681 = vmatpush1.msra.mxu0 0.0
      %682 = vmatprep.subr.mxu0 0.0
      %683 = vmatpush1.msra.mxu0 0.0
      %684 = vmatprep.subr.mxu0 0.0
      %685 = vmatpush1.msra.mxu0 0.0
      %686 = vmatprep.subr.mxu0 0.0
      %687 = vmatpush1.msra.mxu0 0.0
      %688 = vmatprep.subr.mxu0 0.0
      %689 = vmatpush1.msra.mxu0 0.0
      %690 = vmatprep.subr.mxu0 0.0
      %691 = vmatpush1.msra.mxu0 0.0
      %692 = vmatprep.subr.mxu0 0.0
      %693 = vmatpush1.msra.mxu0 0.0
      %694 = vmatprep.subr.mxu0 0.0
      %695 = vmatpush1.msra.mxu0 0.0
      %696 = vmatprep.subr.mxu0 0.0
      %697 = vmatpush1.msra.mxu0 0.0
      %698 = vmatprep.subr.mxu0 0.0
      %699 = vmatpush1.msra.mxu0 0.0
      %700 = vmatprep.subr.mxu0 0.0
      %701 = vmatpush1.msra.mxu0 0.0
      %702 = vmatprep.subr.mxu0 0.0
      %703 = vmatpush1.msra.mxu0 0.0
      %704 = vmatprep.subr.mxu0 0.0
      %705 = vmatpush1.msra.mxu0 0.0
      %706 = vmatprep.subr.mxu0 0.0
      %707 = vmatpush1.msra.mxu0 0.0
      %708 = vmatprep.subr.mxu0 0.0
      %709 = vmatpush1.msra.mxu0 0.0
      %710 = vmatprep.subr.mxu0 0.0
      %711 = vmatpush1.msra.mxu0 0.0
      %712 = vmatprep.subr.mxu0 0.0
      %713 = vmatpush1.msra.mxu0 0.0
      %714 = vmatprep.subr.mxu0 0.0
      %715 = vmatpush1.msra.mxu0 0.0
      %716 = vmatprep.subr.mxu0 0.0
      %717 = vmatpush1.msra.mxu0 0.0
      %718 = vmatprep.subr.mxu0 0.0
      %719 = vmatpush1.msra.mxu0 0.0
      %720 = vmatprep.subr.mxu0 0.0
      %721 = vmatpush1.msra.mxu0 0.0
      %722 = vmatprep.subr.mxu0 0.0
      %723 = vmatpush1.msra.mxu0 0.0
      %724 = vmatprep.mubr.f32.mxu0 0.0
      %v725 = vand.u32 %v351, 4294901760
      %726 = vmatmul.mubr.f32.gmra.mrb[0].mxu0 %v725
      %v727 = vpop.f32.mrb[0].mxu0
      %v728 = vadd.f32 %v654, %v727
      %v729 = vpop.f32.mrb[0].mxu0
      %730 = vdwg.mxu0
      %731 = vmatprep.subr.mxu0 0.0
      %v732 = vand.u32 %v355, 4294901760
      %733 = vmatpush1.msra.mxu0 %v732
      %734 = vmatprep.subr.mxu0 0.0
      %735 = vmatpush1.msra.mxu0 0.0
      %736 = vmatprep.subr.mxu0 0.0
      %737 = vmatpush1.msra.mxu0 0.0
      %738 = vmatprep.subr.mxu0 0.0
      %739 = vmatpush1.msra.mxu0 0.0
      %740 = vmatprep.subr.mxu0 0.0
      %741 = vmatpush1.msra.mxu0 0.0
      %742 = vmatprep.subr.mxu0 0.0
      %743 = vmatpush1.msra.mxu0 0.0
      %744 = vmatprep.subr.mxu0 0.0
      %745 = vmatpush1.msra.mxu0 0.0
      %746 = vmatprep.subr.mxu0 0.0
      %747 = vmatpush1.msra.mxu0 0.0
      %748 = vmatprep.subr.mxu0 0.0
      %749 = vmatpush1.msra.mxu0 0.0
      %750 = vmatprep.subr.mxu0 0.0
      %751 = vmatpush1.msra.mxu0 0.0
      %752 = vmatprep.subr.mxu0 0.0
      %753 = vmatpush1.msra.mxu0 0.0
      %754 = vmatprep.subr.mxu0 0.0
      %755 = vmatpush1.msra.mxu0 0.0
      %756 = vmatprep.subr.mxu0 0.0
      %757 = vmatpush1.msra.mxu0 0.0
      %758 = vmatprep.subr.mxu0 0.0
      %759 = vmatpush1.msra.mxu0 0.0
      %760 = vmatprep.subr.mxu0 0.0
      %761 = vmatpush1.msra.mxu0 0.0
      %762 = vmatprep.subr.mxu0 0.0
      %763 = vmatpush1.msra.mxu0 0.0
      %764 = vmatprep.subr.mxu0 0.0
      %765 = vmatpush1.msra.mxu0 0.0
      %766 = vmatprep.subr.mxu0 0.0
      %767 = vmatpush1.msra.mxu0 0.0
      %768 = vmatprep.subr.mxu0 0.0
      %769 = vmatpush1.msra.mxu0 0.0
      %770 = vmatprep.subr.mxu0 0.0
      %771 = vmatpush1.msra.mxu0 0.0
      %772 = vmatprep.subr.mxu0 0.0
      %773 = vmatpush1.msra.mxu0 0.0
      %774 = vmatprep.subr.mxu0 0.0
      %775 = vmatpush1.msra.mxu0 0.0
      %776 = vmatprep.subr.mxu0 0.0
      %777 = vmatpush1.msra.mxu0 0.0
      %778 = vmatprep.subr.mxu0 0.0
      %779 = vmatpush1.msra.mxu0 0.0
      %780 = vmatprep.subr.mxu0 0.0
      %781 = vmatpush1.msra.mxu0 0.0
      %782 = vmatprep.subr.mxu0 0.0
      %783 = vmatpush1.msra.mxu0 0.0
      %784 = vmatprep.subr.mxu0 0.0
      %785 = vmatpush1.msra.mxu0 0.0
      %786 = vmatprep.subr.mxu0 0.0
      %787 = vmatpush1.msra.mxu0 0.0
      %788 = vmatprep.subr.mxu0 0.0
      %789 = vmatpush1.msra.mxu0 0.0
      %790 = vmatprep.subr.mxu0 0.0
      %791 = vmatpush1.msra.mxu0 0.0
      %792 = vmatprep.subr.mxu0 0.0
      %793 = vmatpush1.msra.mxu0 0.0
      %794 = vmatprep.subr.mxu0 0.0
      %795 = vmatpush1.msra.mxu0 0.0
      %796 = vmatprep.mubr.f32.mxu0 0.0
      %v797 = vand.u32 %v351, 4294901760
      %798 = vmatmul.mubr.f32.gmra.mrb[0].mxu0 %v797
      %v799 = vpop.f32.mrb[0].mxu0
      %v800 = vadd.f32 %v728, %v799
      %v801 = vpop.f32.mrb[0].mxu0
      %802 = vdwg.mxu0
      %vm803 = vcmask 48128
      %v805 = vsel %vm803, %v345, 0
      %vm807 = vcmask 1045504
      %v809 = vsel %vm807, %v346, 0
      %811 = vmatprep.subr.mxu0 0.0
      %v812 = vand.u32 %v809, 4294901760
      %813 = vmatpush1.msra.mxu0 %v812
      %814 = vmatprep.subr.mxu0 0.0
      %815 = vmatpush1.msra.mxu0 0.0
      %816 = vmatprep.subr.mxu0 0.0
      %817 = vmatpush1.msra.mxu0 0.0
      %818 = vmatprep.subr.mxu0 0.0
      %819 = vmatpush1.msra.mxu0 0.0
      %820 = vmatprep.subr.mxu0 0.0
      %821 = vmatpush1.msra.mxu0 0.0
      %822 = vmatprep.subr.mxu0 0.0
      %823 = vmatpush1.msra.mxu0 0.0
      %824 = vmatprep.subr.mxu0 0.0
      %825 = vmatpush1.msra.mxu0 0.0
      %826 = vmatprep.subr.mxu0 0.0
      %827 = vmatpush1.msra.mxu0 0.0
      %828 = vmatprep.subr.mxu0 0.0
      %829 = vmatpush1.msra.mxu0 0.0
      %830 = vmatprep.subr.mxu0 0.0
      %831 = vmatpush1.msra.mxu0 0.0
      %832 = vmatprep.subr.mxu0 0.0
      %833 = vmatpush1.msra.mxu0 0.0
      %834 = vmatprep.subr.mxu0 0.0
      %835 = vmatpush1.msra.mxu0 0.0
      %836 = vmatprep.subr.mxu0 0.0
      %837 = vmatpush1.msra.mxu0 0.0
      %838 = vmatprep.subr.mxu0 0.0
      %839 = vmatpush1.msra.mxu0 0.0
      %840 = vmatprep.subr.mxu0 0.0
      %841 = vmatpush1.msra.mxu0 0.0
      %842 = vmatprep.subr.mxu0 0.0
      %843 = vmatpush1.msra.mxu0 0.0
      %844 = vmatprep.subr.mxu0 0.0
      %845 = vmatpush1.msra.mxu0 0.0
      %846 = vmatprep.subr.mxu0 0.0
      %847 = vmatpush1.msra.mxu0 0.0
      %848 = vmatprep.subr.mxu0 0.0
      %849 = vmatpush1.msra.mxu0 0.0
      %850 = vmatprep.subr.mxu0 0.0
      %851 = vmatpush1.msra.mxu0 0.0
      %852 = vmatprep.subr.mxu0 0.0
      %853 = vmatpush1.msra.mxu0 0.0
      %854 = vmatprep.subr.mxu0 0.0
      %855 = vmatpush1.msra.mxu0 0.0
      %856 = vmatprep.subr.mxu0 0.0
      %857 = vmatpush1.msra.mxu0 0.0
      %858 = vmatprep.subr.mxu0 0.0
      %859 = vmatpush1.msra.mxu0 0.0
      %860 = vmatprep.subr.mxu0 0.0
      %861 = vmatpush1.msra.mxu0 0.0
      %862 = vmatprep.subr.mxu0 0.0
      %863 = vmatpush1.msra.mxu0 0.0
      %864 = vmatprep.subr.mxu0 0.0
      %865 = vmatpush1.msra.mxu0 0.0
      %866 = vmatprep.subr.mxu0 0.0
      %867 = vmatpush1.msra.mxu0 0.0
      %868 = vmatprep.subr.mxu0 0.0
      %869 = vmatpush1.msra.mxu0 0.0
      %870 = vmatprep.subr.mxu0 0.0
      %871 = vmatpush1.msra.mxu0 0.0
      %872 = vmatprep.subr.mxu0 0.0
      %873 = vmatpush1.msra.mxu0 0.0
      %874 = vmatprep.subr.mxu0 0.0
      %875 = vmatpush1.msra.mxu0 0.0
      %876 = vmatprep.mubr.f32.mxu0 0.0
      %v877 = vand.u32 %v805, 4294901760
      %v878 = vsub.f32 %v805, %v877
      %v879 = vand.u32 %v878, 4294901760
      %v880 = vsub.f32 %v878, %v879
      %v881 = vand.u32 %v880, 4294901760
      %882 = vmatmul.mubr.f32.gmra.mrb[0].mxu0 %v881
      %v883 = vpop.f32.mrb[0].mxu0
      %v884 = vadd.f32 %v800, %v883
      %v885 = vpop.f32.mrb[0].mxu0
      %886 = vdwg.mxu0
      %887 = vmatprep.subr.mxu0 0.0
      %v888 = vand.u32 %v809, 4294901760
      %v889 = vsub.f32 %v809, %v888
      %v890 = vand.u32 %v889, 4294901760
      %v891 = vsub.f32 %v889, %v890
      %v892 = vand.u32 %v891, 4294901760
      %893 = vmatpush1.msra.mxu0 %v892
      %894 = vmatprep.subr.mxu0 0.0
      %895 = vmatpush1.msra.mxu0 0.0
      %896 = vmatprep.subr.mxu0 0.0
      %897 = vmatpush1.msra.mxu0 0.0
      %898 = vmatprep.subr.mxu0 0.0
      %899 = vmatpush1.msra.mxu0 0.0
      %900 = vmatprep.subr.mxu0 0.0
      %901 = vmatpush1.msra.mxu0 0.0
      %902 = vmatprep.subr.mxu0 0.0
      %903 = vmatpush1.msra.mxu0 0.0
      %904 = vmatprep.subr.mxu0 0.0
      %905 = vmatpush1.msra.mxu0 0.0
      %906 = vmatprep.subr.mxu0 0.0
      %907 = vmatpush1.msra.mxu0 0.0
      %908 = vmatprep.subr.mxu0 0.0
      %909 = vmatpush1.msra.mxu0 0.0
      %910 = vmatprep.subr.mxu0 0.0
      %911 = vmatpush1.msra.mxu0 0.0
      %912 = vmatprep.subr.mxu0 0.0
      %913 = vmatpush1.msra.mxu0 0.0
      %914 = vmatprep.subr.mxu0 0.0
      %915 = vmatpush1.msra.mxu0 0.0
      %916 = vmatprep.subr.mxu0 0.0
      %917 = vmatpush1.msra.mxu0 0.0
      %918 = vmatprep.subr.mxu0 0.0
      %919 = vmatpush1.msra.mxu0 0.0
      %920 = vmatprep.subr.mxu0 0.0
      %921 = vmatpush1.msra.mxu0 0.0
      %922 = vmatprep.subr.mxu0 0.0
      %923 = vmatpush1.msra.mxu0 0.0
      %924 = vmatprep.subr.mxu0 0.0
      %925 = vmatpush1.msra.mxu0 0.0
      %926 = vmatprep.subr.mxu0 0.0
      %927 = vmatpush1.msra.mxu0 0.0
      %928 = vmatprep.subr.mxu0 0.0
      %929 = vmatpush1.msra.mxu0 0.0
      %930 = vmatprep.subr.mxu0 0.0
      %931 = vmatpush1.msra.mxu0 0.0
      %932 = vmatprep.subr.mxu0 0.0
      %933 = vmatpush1.msra.mxu0 0.0
      %934 = vmatprep.subr.mxu0 0.0
      %935 = vmatpush1.msra.mxu0 0.0
      %936 = vmatprep.subr.mxu0 0.0
      %937 = vmatpush1.msra.mxu0 0.0
      %938 = vmatprep.subr.mxu0 0.0
      %939 = vmatpush1.msra.mxu0 0.0
      %940 = vmatprep.subr.mxu0 0.0
      %941 = vmatpush1.msra.mxu0 0.0
      %942 = vmatprep.subr.mxu0 0.0
      %943 = vmatpush1.msra.mxu0 0.0
      %944 = vmatprep.subr.mxu0 0.0
      %945 = vmatpush1.msra.mxu0 0.0
      %946 = vmatprep.subr.mxu0 0.0
      %947 = vmatpush1.msra.mxu0 0.0
      %948 = vmatprep.subr.mxu0 0.0
      %949 = vmatpush1.msra.mxu0 0.0
      %950 = vmatprep.subr.mxu0 0.0
      %951 = vmatpush1.msra.mxu0 0.0
      %952 = vmatprep.subr.mxu0 0.0
      %953 = vmatpush1.msra.mxu0 0.0
      %954 = vmatprep.subr.mxu0 0.0
      %955 = vmatpush1.msra.mxu0 0.0
      %956 = vmatprep.mubr.f32.mxu0 0.0
      %v957 = vand.u32 %v805, 4294901760
      %958 = vmatmul.mubr.f32.gmra.mrb[0].mxu0 %v957
      %v959 = vpop.f32.mrb[0].mxu0
      %v960 = vadd.f32 %v884, %v959
      %v961 = vpop.f32.mrb[0].mxu0
      %962 = vdwg.mxu0
      %963 = vmatprep.subr.mxu0 0.0
      %v964 = vand.u32 %v809, 4294901760
      %v965 = vsub.f32 %v809, %v964
      %966 = vmatpush1.msra.mxu0 %v965
      %967 = vmatprep.subr.mxu0 0.0
      %968 = vmatpush1.msra.mxu0 0.0
      %969 = vmatprep.subr.mxu0 0.0
      %970 = vmatpush1.msra.mxu0 0.0
      %971 = vmatprep.subr.mxu0 0.0
      %972 = vmatpush1.msra.mxu0 0.0
      %973 = vmatprep.subr.mxu0 0.0
      %974 = vmatpush1.msra.mxu0 0.0
      %975 = vmatprep.subr.mxu0 0.0
      %976 = vmatpush1.msra.mxu0 0.0
      %977 = vmatprep.subr.mxu0 0.0
      %978 = vmatpush1.msra.mxu0 0.0
      %979 = vmatprep.subr.mxu0 0.0
      %980 = vmatpush1.msra.mxu0 0.0
      %981 = vmatprep.subr.mxu0 0.0
      %982 = vmatpush1.msra.mxu0 0.0
      %983 = vmatprep.subr.mxu0 0.0
      %984 = vmatpush1.msra.mxu0 0.0
      %985 = vmatprep.subr.mxu0 0.0
      %986 = vmatpush1.msra.mxu0 0.0
      %987 = vmatprep.subr.mxu0 0.0
      %988 = vmatpush1.msra.mxu0 0.0
      %989 = vmatprep.subr.mxu0 0.0
      %990 = vmatpush1.msra.mxu0 0.0
      %991 = vmatprep.subr.mxu0 0.0
      %992 = vmatpush1.msra.mxu0 0.0
      %993 = vmatprep.subr.mxu0 0.0
      %994 = vmatpush1.msra.mxu0 0.0
      %995 = vmatprep.subr.mxu0 0.0
      %996 = vmatpush1.msra.mxu0 0.0
      %997 = vmatprep.subr.mxu0 0.0
      %998 = vmatpush1.msra.mxu0 0.0
      %999 = vmatprep.subr.mxu0 0.0
      %1000 = vmatpush1.msra.mxu0 0.0
      %1001 = vmatprep.subr.mxu0 0.0
      %1002 = vmatpush1.msra.mxu0 0.0
      %1003 = vmatprep.subr.mxu0 0.0
      %1004 = vmatpush1.msra.mxu0 0.0
      %1005 = vmatprep.subr.mxu0 0.0
      %1006 = vmatpush1.msra.mxu0 0.0
      %1007 = vmatprep.subr.mxu0 0.0
      %1008 = vmatpush1.msra.mxu0 0.0
      %1009 = vmatprep.subr.mxu0 0.0
      %1010 = vmatpush1.msra.mxu0 0.0
      %1011 = vmatprep.subr.mxu0 0.0
      %1012 = vmatpush1.msra.mxu0 0.0
      %1013 = vmatprep.subr.mxu0 0.0
      %1014 = vmatpush1.msra.mxu0 0.0
      %1015 = vmatprep.subr.mxu0 0.0
      %1016 = vmatpush1.msra.mxu0 0.0
      %1017 = vmatprep.subr.mxu0 0.0
      %1018 = vmatpush1.msra.mxu0 0.0
      %1019 = vmatprep.subr.mxu0 0.0
      %1020 = vmatpush1.msra.mxu0 0.0
      %1021 = vmatprep.subr.mxu0 0.0
      %1022 = vmatpush1.msra.mxu0 0.0
      %1023 = vmatprep.subr.mxu0 0.0
      %1024 = vmatpush1.msra.mxu0 0.0
      %1025 = vmatprep.subr.mxu0 0.0
      %1026 = vmatpush1.msra.mxu0 0.0
      %1027 = vmatprep.subr.mxu0 0.0
      %1028 = vmatpush1.msra.mxu0 0.0
      %1029 = vmatprep.mubr.f32.mxu0 0.0
      %v1030 = vand.u32 %v805, 4294901760
      %v1031 = vsub.f32 %v805, %v1030
      %1032 = vmatmul.mubr.f32.gmra.mrb[0].mxu0 %v1031
      %v1033 = vpop.f32.mrb[0].mxu0
      %v1034 = vadd.f32 %v960, %v1033
      %v1035 = vpop.f32.mrb[0].mxu0
      %1036 = vdwg.mxu0
      %1037 = vmatprep.subr.mxu0 0.0
      %v1038 = vand.u32 %v809, 4294901760
      %1039 = vmatpush1.msra.mxu0 %v1038
      %1040 = vmatprep.subr.mxu0 0.0
      %1041 = vmatpush1.msra.mxu0 0.0
      %1042 = vmatprep.subr.mxu0 0.0
      %1043 = vmatpush1.msra.mxu0 0.0
      %1044 = vmatprep.subr.mxu0 0.0
      %1045 = vmatpush1.msra.mxu0 0.0
      %1046 = vmatprep.subr.mxu0 0.0
      %1047 = vmatpush1.msra.mxu0 0.0
      %1048 = vmatprep.subr.mxu0 0.0
      %1049 = vmatpush1.msra.mxu0 0.0
      %1050 = vmatprep.subr.mxu0 0.0
      %1051 = vmatpush1.msra.mxu0 0.0
      %1052 = vmatprep.subr.mxu0 0.0
      %1053 = vmatpush1.msra.mxu0 0.0
      %1054 = vmatprep.subr.mxu0 0.0
      %1055 = vmatpush1.msra.mxu0 0.0
      %1056 = vmatprep.subr.mxu0 0.0
      %1057 = vmatpush1.msra.mxu0 0.0
      %1058 = vmatprep.subr.mxu0 0.0
      %1059 = vmatpush1.msra.mxu0 0.0
      %1060 = vmatprep.subr.mxu0 0.0
      %1061 = vmatpush1.msra.mxu0 0.0
      %1062 = vmatprep.subr.mxu0 0.0
      %1063 = vmatpush1.msra.mxu0 0.0
      %1064 = vmatprep.subr.mxu0 0.0
      %1065 = vmatpush1.msra.mxu0 0.0
      %1066 = vmatprep.subr.mxu0 0.0
      %1067 = vmatpush1.msra.mxu0 0.0
      %1068 = vmatprep.subr.mxu0 0.0
      %1069 = vmatpush1.msra.mxu0 0.0
      %1070 = vmatprep.subr.mxu0 0.0
      %1071 = vmatpush1.msra.mxu0 0.0
      %1072 = vmatprep.subr.mxu0 0.0
      %1073 = vmatpush1.msra.mxu0 0.0
      %1074 = vmatprep.subr.mxu0 0.0
      %1075 = vmatpush1.msra.mxu0 0.0
      %1076 = vmatprep.subr.mxu0 0.0
      %1077 = vmatpush1.msra.mxu0 0.0
      %1078 = vmatprep.subr.mxu0 0.0
      %1079 = vmatpush1.msra.mxu0 0.0
      %1080 = vmatprep.subr.mxu0 0.0
      %1081 = vmatpush1.msra.mxu0 0.0
      %1082 = vmatprep.subr.mxu0 0.0
      %1083 = vmatpush1.msra.mxu0 0.0
      %1084 = vmatprep.subr.mxu0 0.0
      %1085 = vmatpush1.msra.mxu0 0.0
      %1086 = vmatprep.subr.mxu0 0.0
      %1087 = vmatpush1.msra.mxu0 0.0
      %1088 = vmatprep.subr.mxu0 0.0
      %1089 = vmatpush1.msra.mxu0 0.0
      %1090 = vmatprep.subr.mxu0 0.0
      %1091 = vmatpush1.msra.mxu0 0.0
      %1092 = vmatprep.subr.mxu0 0.0
      %1093 = vmatpush1.msra.mxu0 0.0
      %1094 = vmatprep.subr.mxu0 0.0
      %1095 = vmatpush1.msra.mxu0 0.0
      %1096 = vmatprep.subr.mxu0 0.0
      %1097 = vmatpush1.msra.mxu0 0.0
      %1098 = vmatprep.subr.mxu0 0.0
      %1099 = vmatpush1.msra.mxu0 0.0
      %1100 = vmatprep.subr.mxu0 0.0
      %1101 = vmatpush1.msra.mxu0 0.0
      %1102 = vmatprep.mubr.f32.mxu0 0.0
      %v1103 = vand.u32 %v805, 4294901760
      %v1104 = vsub.f32 %v805, %v1103
      %v1105 = vand.u32 %v1104, 4294901760
      %1106 = vmatmul.mubr.f32.gmra.mrb[0].mxu0 %v1105
      %v1107 = vpop.f32.mrb[0].mxu0
      %v1108 = vadd.f32 %v1034, %v1107
      %v1109 = vpop.f32.mrb[0].mxu0
      %1110 = vdwg.mxu0
      %1111 = vmatprep.subr.mxu0 0.0
      %v1112 = vand.u32 %v809, 4294901760
      %v1113 = vsub.f32 %v809, %v1112
      %v1114 = vand.u32 %v1113, 4294901760
      %1115 = vmatpush1.msra.mxu0 %v1114
      %1116 = vmatprep.subr.mxu0 0.0
      %1117 = vmatpush1.msra.mxu0 0.0
      %1118 = vmatprep.subr.mxu0 0.0
      %1119 = vmatpush1.msra.mxu0 0.0
      %1120 = vmatprep.subr.mxu0 0.0
      %1121 = vmatpush1.msra.mxu0 0.0
      %1122 = vmatprep.subr.mxu0 0.0
      %1123 = vmatpush1.msra.mxu0 0.0
      %1124 = vmatprep.subr.mxu0 0.0
      %1125 = vmatpush1.msra.mxu0 0.0
      %1126 = vmatprep.subr.mxu0 0.0
      %1127 = vmatpush1.msra.mxu0 0.0
      %1128 = vmatprep.subr.mxu0 0.0
      %1129 = vmatpush1.msra.mxu0 0.0
      %1130 = vmatprep.subr.mxu0 0.0
      %1131 = vmatpush1.msra.mxu0 0.0
      %1132 = vmatprep.subr.mxu0 0.0
      %1133 = vmatpush1.msra.mxu0 0.0
      %1134 = vmatprep.subr.mxu0 0.0
      %1135 = vmatpush1.msra.mxu0 0.0
      %1136 = vmatprep.subr.mxu0 0.0
      %1137 = vmatpush1.msra.mxu0 0.0
      %1138 = vmatprep.subr.mxu0 0.0
      %1139 = vmatpush1.msra.mxu0 0.0
      %1140 = vmatprep.subr.mxu0 0.0
      %1141 = vmatpush1.msra.mxu0 0.0
      %1142 = vmatprep.subr.mxu0 0.0
      %1143 = vmatpush1.msra.mxu0 0.0
      %1144 = vmatprep.subr.mxu0 0.0
      %1145 = vmatpush1.msra.mxu0 0.0
      %1146 = vmatprep.subr.mxu0 0.0
      %1147 = vmatpush1.msra.mxu0 0.0
      %1148 = vmatprep.subr.mxu0 0.0
      %1149 = vmatpush1.msra.mxu0 0.0
      %1150 = vmatprep.subr.mxu0 0.0
      %1151 = vmatpush1.msra.mxu0 0.0
      %1152 = vmatprep.subr.mxu0 0.0
      %1153 = vmatpush1.msra.mxu0 0.0
      %1154 = vmatprep.subr.mxu0 0.0
      %1155 = vmatpush1.msra.mxu0 0.0
      %1156 = vmatprep.subr.mxu0 0.0
      %1157 = vmatpush1.msra.mxu0 0.0
      %1158 = vmatprep.subr.mxu0 0.0
      %1159 = vmatpush1.msra.mxu0 0.0
      %1160 = vmatprep.subr.mxu0 0.0
      %1161 = vmatpush1.msra.mxu0 0.0
      %1162 = vmatprep.subr.mxu0 0.0
      %1163 = vmatpush1.msra.mxu0 0.0
      %1164 = vmatprep.subr.mxu0 0.0
      %1165 = vmatpush1.msra.mxu0 0.0
      %1166 = vmatprep.subr.mxu0 0.0
      %1167 = vmatpush1.msra.mxu0 0.0
      %1168 = vmatprep.subr.mxu0 0.0
      %1169 = vmatpush1.msra.mxu0 0.0
      %1170 = vmatprep.subr.mxu0 0.0
      %1171 = vmatpush1.msra.mxu0 0.0
      %1172 = vmatprep.subr.mxu0 0.0
      %1173 = vmatpush1.msra.mxu0 0.0
      %1174 = vmatprep.subr.mxu0 0.0
      %1175 = vmatpush1.msra.mxu0 0.0
      %1176 = vmatprep.subr.mxu0 0.0
      %1177 = vmatpush1.msra.mxu0 0.0
      %1178 = vmatprep.mubr.f32.mxu0 0.0
      %v1179 = vand.u32 %v805, 4294901760
      %1180 = vmatmul.mubr.f32.gmra.mrb[0].mxu0 %v1179
      %v1181 = vpop.f32.mrb[0].mxu0
      %v1182 = vadd.f32 %v1108, %v1181
      %v1183 = vpop.f32.mrb[0].mxu0
      %1184 = vdwg.mxu0
      %1185 = vmatprep.subr.mxu0 0.0
      %v1186 = vand.u32 %v809, 4294901760
      %1187 = vmatpush1.msra.mxu0 %v1186
      %1188 = vmatprep.subr.mxu0 0.0
      %1189 = vmatpush1.msra.mxu0 0.0
      %1190 = vmatprep.subr.mxu0 0.0
      %1191 = vmatpush1.msra.mxu0 0.0
      %1192 = vmatprep.subr.mxu0 0.0
      %1193 = vmatpush1.msra.mxu0 0.0
      %1194 = vmatprep.subr.mxu0 0.0
      %1195 = vmatpush1.msra.mxu0 0.0
      %1196 = vmatprep.subr.mxu0 0.0
      %1197 = vmatpush1.msra.mxu0 0.0
      %1198 = vmatprep.subr.mxu0 0.0
      %1199 = vmatpush1.msra.mxu0 0.0
      %1200 = vmatprep.subr.mxu0 0.0
      %1201 = vmatpush1.msra.mxu0 0.0
      %1202 = vmatprep.subr.mxu0 0.0
      %1203 = vmatpush1.msra.mxu0 0.0
      %1204 = vmatprep.subr.mxu0 0.0
      %1205 = vmatpush1.msra.mxu0 0.0
      %1206 = vmatprep.subr.mxu0 0.0
      %1207 = vmatpush1.msra.mxu0 0.0
      %1208 = vmatprep.subr.mxu0 0.0
      %1209 = vmatpush1.msra.mxu0 0.0
      %1210 = vmatprep.subr.mxu0 0.0
      %1211 = vmatpush1.msra.mxu0 0.0
      %1212 = vmatprep.subr.mxu0 0.0
      %1213 = vmatpush1.msra.mxu0 0.0
      %1214 = vmatprep.subr.mxu0 0.0
      %1215 = vmatpush1.msra.mxu0 0.0
      %1216 = vmatprep.subr.mxu0 0.0
      %1217 = vmatpush1.msra.mxu0 0.0
      %1218 = vmatprep.subr.mxu0 0.0
      %1219 = vmatpush1.msra.mxu0 0.0
      %1220 = vmatprep.subr.mxu0 0.0
      %1221 = vmatpush1.msra.mxu0 0.0
      %1222 = vmatprep.subr.mxu0 0.0
      %1223 = vmatpush1.msra.mxu0 0.0
      %1224 = vmatprep.subr.mxu0 0.0
      %1225 = vmatpush1.msra.mxu0 0.0
      %1226 = vmatprep.subr.mxu0 0.0
      %1227 = vmatpush1.msra.mxu0 0.0
      %1228 = vmatprep.subr.mxu0 0.0
      %1229 = vmatpush1.msra.mxu0 0.0
      %1230 = vmatprep.subr.mxu0 0.0
      %1231 = vmatpush1.msra.mxu0 0.0
      %1232 = vmatprep.subr.mxu0 0.0
      %1233 = vmatpush1.msra.mxu0 0.0
      %1234 = vmatprep.subr.mxu0 0.0
      %1235 = vmatpush1.msra.mxu0 0.0
      %1236 = vmatprep.subr.mxu0 0.0
      %1237 = vmatpush1.msra.mxu0 0.0
      %1238 = vmatprep.subr.mxu0 0.0
      %1239 = vmatpush1.msra.mxu0 0.0
      %1240 = vmatprep.subr.mxu0 0.0
      %1241 = vmatpush1.msra.mxu0 0.0
      %1242 = vmatprep.subr.mxu0 0.0
      %1243 = vmatpush1.msra.mxu0 0.0
      %1244 = vmatprep.subr.mxu0 0.0
      %1245 = vmatpush1.msra.mxu0 0.0
      %1246 = vmatprep.subr.mxu0 0.0
      %1247 = vmatpush1.msra.mxu0 0.0
      %1248 = vmatprep.subr.mxu0 0.0
      %1249 = vmatpush1.msra.mxu0 0.0
      %1250 = vmatprep.mubr.f32.mxu0 0.0
      %v1251 = vand.u32 %v805, 4294901760
      %1252 = vmatmul.mubr.f32.gmra.mrb[0].mxu0 %v1251
      %v1253 = vpop.f32.mrb[0].mxu0
      %v1254 = vadd.f32 %v1182, %v1253
      %v1255 = vpop.f32.mrb[0].mxu0
      %1256 = vdwg.mxu0
      %v1257 = vld [vmem:[%s4] sm:$0x1]
      %v1259 = vlaneseq
      %v1260 = vshrl.u32 %v1259, 7
      %v1261 = vsub.s32 0, %v1260
      %v1262 = vrot.slane %v1257, %v1261
      %v1264 = vadd.f32 %v1254, %v1262
      %v1265 = vmax.f32 %v1264, 0.0
      %v1266 = vld [vmem:[%s5] sm:$0xff]
      %v1267 = vld [vmem:[%s5 + $0x8] sm:$0xff]
      %v1268 = vld [vmem:[%s5 + $0x10] sm:$0xf]
      %v1269 = vld [vmem:[%s6] sm:$0x1]
      %v1271 = vlaneseq
      %v1272 = vshrl.u32 %v1271, 7
      %v1273 = vsub.s32 0, %v1272
      %v1274 = vrot.slane %v1269, %v1273
      %vm1276 = vcmask 162816
      %v1278 = vsel %vm1276, %v1265, 0
      %v1281 = vsel %vm353, %v1268, 0
      %1283 = vmatprep.subr.mxu0 0.0
      %v1284 = vand.u32 %v1266, 4294901760
      %1285 = vmatpush1.msra.mxu0 %v1284
      %1286 = vmatprep.subr.mxu0 0.0
      %v1287 = vand.u32 %v1267, 4294901760
      %1288 = vmatpush1.msra.mxu0 %v1287
      %1289 = vmatprep.subr.mxu0 0.0
      %v1290 = vand.u32 %v1281, 4294901760
      %1291 = vmatpush1.msra.mxu0 %v1290
      %1292 = vmatprep.subr.mxu0 0.0
      %1293 = vmatpush1.msra.mxu0 0.0
      %1294 = vmatprep.subr.mxu0 0.0
      %1295 = vmatpush1.msra.mxu0 0.0
      %1296 = vmatprep.subr.mxu0 0.0
      %1297 = vmatpush1.msra.mxu0 0.0
      %1298 = vmatprep.subr.mxu0 0.0
      %1299 = vmatpush1.msra.mxu0 0.0
      %1300 = vmatprep.subr.mxu0 0.0
      %1301 = vmatpush1.msra.mxu0 0.0
      %1302 = vmatprep.subr.mxu0 0.0
      %1303 = vmatpush1.msra.mxu0 0.0
      %1304 = vmatprep.subr.mxu0 0.0
      %1305 = vmatpush1.msra.mxu0 0.0
      %1306 = vmatprep.subr.mxu0 0.0
      %1307 = vmatpush1.msra.mxu0 0.0
      %1308 = vmatprep.subr.mxu0 0.0
      %1309 = vmatpush1.msra.mxu0 0.0
      %1310 = vmatprep.subr.mxu0 0.0
      %1311 = vmatpush1.msra.mxu0 0.0
      %1312 = vmatprep.subr.mxu0 0.0
      %1313 = vmatpush1.msra.mxu0 0.0
      %1314 = vmatprep.subr.mxu0 0.0
      %1315 = vmatpush1.msra.mxu0 0.0
      %1316 = vmatprep.subr.mxu0 0.0
      %1317 = vmatpush1.msra.mxu0 0.0
      %1318 = vmatprep.subr.mxu0 0.0
      %1319 = vmatpush1.msra.mxu0 0.0
      %1320 = vmatprep.subr.mxu0 0.0
      %1321 = vmatpush1.msra.mxu0 0.0
      %1322 = vmatprep.subr.mxu0 0.0
      %1323 = vmatpush1.msra.mxu0 0.0
      %1324 = vmatprep.subr.mxu0 0.0
      %1325 = vmatpush1.msra.mxu0 0.0
      %1326 = vmatprep.subr.mxu0 0.0
      %1327 = vmatpush1.msra.mxu0 0.0
      %1328 = vmatprep.subr.mxu0 0.0
      %1329 = vmatpush1.msra.mxu0 0.0
      %1330 = vmatprep.subr.mxu0 0.0
      %1331 = vmatpush1.msra.mxu0 0.0
      %1332 = vmatprep.subr.mxu0 0.0
      %1333 = vmatpush1.msra.mxu0 0.0
      %1334 = vmatprep.subr.mxu0 0.0
      %1335 = vmatpush1.msra.mxu0 0.0
      %1336 = vmatprep.subr.mxu0 0.0
      %1337 = vmatpush1.msra.mxu0 0.0
      %1338 = vmatprep.subr.mxu0 0.0
      %1339 = vmatpush1.msra.mxu0 0.0
      %1340 = vmatprep.subr.mxu0 0.0
      %1341 = vmatpush1.msra.mxu0 0.0
      %1342 = vmatprep.subr.mxu0 0.0
      %1343 = vmatpush1.msra.mxu0 0.0
      %1344 = vmatprep.subr.mxu0 0.0
      %1345 = vmatpush1.msra.mxu0 0.0
      %1346 = vmatprep.subr.mxu0 0.0
      %1347 = vmatpush1.msra.mxu0 0.0
      %1348 = vmatprep.subr.mxu0 0.0
      %1349 = vmatpush1.msra.mxu0 0.0
      %1350 = vmatprep.mubr.f32.mxu0 0.0
      %v1351 = vand.u32 %v1278, 4294901760
      %v1352 = vsub.f32 %v1278, %v1351
      %v1353 = vand.u32 %v1352, 4294901760
      %v1354 = vsub.f32 %v1352, %v1353
      %v1355 = vand.u32 %v1354, 4294901760
      %1356 = vmatmul.mubr.f32.gmra.mrb[0].mxu0 %v1355
      %v1357 = vpop.f32.mrb[0].mxu0
      %v1358 = vadd.f32 %v1274, %v1357
      %v1359 = vpop.f32.mrb[0].mxu0
      %1360 = vdwg.mxu0
      %1361 = vmatprep.subr.mxu0 0.0
      %v1362 = vand.u32 %v1266, 4294901760
      %v1363 = vsub.f32 %v1266, %v1362
      %v1364 = vand.u32 %v1363, 4294901760
      %v1365 = vsub.f32 %v1363, %v1364
      %v1366 = vand.u32 %v1365, 4294901760
      %1367 = vmatpush1.msra.mxu0 %v1366
      %1368 = vmatprep.subr.mxu0 0.0
      %v1369 = vand.u32 %v1267, 4294901760
      %v1370 = vsub.f32 %v1267, %v1369
      %v1371 = vand.u32 %v1370, 4294901760
      %v1372 = vsub.f32 %v1370, %v1371
      %v1373 = vand.u32 %v1372, 4294901760
      %1374 = vmatpush1.msra.mxu0 %v1373
      %1375 = vmatprep.subr.mxu0 0.0
      %v1376 = vand.u32 %v1281, 4294901760
      %v1377 = vsub.f32 %v1281, %v1376
      %v1378 = vand.u32 %v1377, 4294901760
      %v1379 = vsub.f32 %v1377, %v1378
      %v1380 = vand.u32 %v1379, 4294901760
      %1381 = vmatpush1.msra.mxu0 %v1380
      %1382 = vmatprep.subr.mxu0 0.0
      %1383 = vmatpush1.msra.mxu0 0.0
      %1384 = vmatprep.subr.mxu0 0.0
      %1385 = vmatpush1.msra.mxu0 0.0
      %1386 = vmatprep.subr.mxu0 0.0
      %1387 = vmatpush1.msra.mxu0 0.0
      %1388 = vmatprep.subr.mxu0 0.0
      %1389 = vmatpush1.msra.mxu0 0.0
      %1390 = vmatprep.subr.mxu0 0.0
      %1391 = vmatpush1.msra.mxu0 0.0
      %1392 = vmatprep.subr.mxu0 0.0
      %1393 = vmatpush1.msra.mxu0 0.0
      %1394 = vmatprep.subr.mxu0 0.0
      %1395 = vmatpush1.msra.mxu0 0.0
      %1396 = vmatprep.subr.mxu0 0.0
      %1397 = vmatpush1.msra.mxu0 0.0
      %1398 = vmatprep.subr.mxu0 0.0
      %1399 = vmatpush1.msra.mxu0 0.0
      %1400 = vmatprep.subr.mxu0 0.0
      %1401 = vmatpush1.msra.mxu0 0.0
      %1402 = vmatprep.subr.mxu0 0.0
      %1403 = vmatpush1.msra.mxu0 0.0
      %1404 = vmatprep.subr.mxu0 0.0
      %1405 = vmatpush1.msra.mxu0 0.0
      %1406 = vmatprep.subr.mxu0 0.0
      %1407 = vmatpush1.msra.mxu0 0.0
      %1408 = vmatprep.subr.mxu0 0.0
      %1409 = vmatpush1.msra.mxu0 0.0
      %1410 = vmatprep.subr.mxu0 0.0
      %1411 = vmatpush1.msra.mxu0 0.0
      %1412 = vmatprep.subr.mxu0 0.0
      %1413 = vmatpush1.msra.mxu0 0.0
      %1414 = vmatprep.subr.mxu0 0.0
      %1415 = vmatpush1.msra.mxu0 0.0
      %1416 = vmatprep.subr.mxu0 0.0
      %1417 = vmatpush1.msra.mxu0 0.0
      %1418 = vmatprep.subr.mxu0 0.0
      %1419 = vmatpush1.msra.mxu0 0.0
      %1420 = vmatprep.subr.mxu0 0.0
      %1421 = vmatpush1.msra.mxu0 0.0
      %1422 = vmatprep.subr.mxu0 0.0
      %1423 = vmatpush1.msra.mxu0 0.0
      %1424 = vmatprep.subr.mxu0 0.0
      %1425 = vmatpush1.msra.mxu0 0.0
      %1426 = vmatprep.subr.mxu0 0.0
      %1427 = vmatpush1.msra.mxu0 0.0
      %1428 = vmatprep.subr.mxu0 0.0
      %1429 = vmatpush1.msra.mxu0 0.0
      %1430 = vmatprep.subr.mxu0 0.0
      %1431 = vmatpush1.msra.mxu0 0.0
      %1432 = vmatprep.subr.mxu0 0.0
      %1433 = vmatpush1.msra.mxu0 0.0
      %1434 = vmatprep.subr.mxu0 0.0
      %1435 = vmatpush1.msra.mxu0 0.0
      %1436 = vmatprep.subr.mxu0 0.0
      %1437 = vmatpush1.msra.mxu0 0.0
      %1438 = vmatprep.subr.mxu0 0.0
      %1439 = vmatpush1.msra.mxu0 0.0
      %1440 = vmatprep.mubr.f32.mxu0 0.0
      %v1441 = vand.u32 %v1278, 4294901760
      %1442 = vmatmul.mubr.f32.gmra.mrb[0].mxu0 %v1441
      %v1443 = vpop.f32.mrb[0].mxu0
      %v1444 = vadd.f32 %v1358, %v1443
      %v1445 = vpop.f32.mrb[0].mxu0
      %1446 = vdwg.mxu0
      %1447 = vmatprep.subr.mxu0 0.0
      %v1448 = vand.u32 %v1266, 4294901760
      %v1449 = vsub.f32 %v1266, %v1448
      %1450 = vmatpush1.msra.mxu0 %v1449
      %1451 = vmatprep.subr.mxu0 0.0
      %v1452 = vand.u32 %v1267, 4294901760
      %v1453 = vsub.f32 %v1267, %v1452
      %1454 = vmatpush1.msra.mxu0 %v1453
      %1455 = vmatprep.subr.mxu0 0.0
      %v1456 = vand.u32 %v1281, 4294901760
      %v1457 = vsub.f32 %v1281, %v1456
      %1458 = vmatpush1.msra.mxu0 %v1457
      %1459 = vmatprep.subr.mxu0 0.0
      %1460 = vmatpush1.msra.mxu0 0.0
      %1461 = vmatprep.subr.mxu0 0.0
      %1462 = vmatpush1.msra.mxu0 0.0
      %1463 = vmatprep.subr.mxu0 0.0
      %1464 = vmatpush1.msra.mxu0 0.0
      %1465 = vmatprep.subr.mxu0 0.0
      %1466 = vmatpush1.msra.mxu0 0.0
      %1467 = vmatprep.subr.mxu0 0.0
      %1468 = vmatpush1.msra.mxu0 0.0
      %1469 = vmatprep.subr.mxu0 0.0
      %1470 = vmatpush1.msra.mxu0 0.0
      %1471 = vmatprep.subr.mxu0 0.0
      %1472 = vmatpush1.msra.mxu0 0.0
      %1473 = vmatprep.subr.mxu0 0.0
      %1474 = vmatpush1.msra.mxu0 0.0
      %1475 = vmatprep.subr.mxu0 0.0
      %1476 = vmatpush1.msra.mxu0 0.0
      %1477 = vmatprep.subr.mxu0 0.0
      %1478 = vmatpush1.msra.mxu0 0.0
      %1479 = vmatprep.subr.mxu0 0.0
      %1480 = vmatpush1.msra.mxu0 0.0
      %1481 = vmatprep.subr.mxu0 0.0
      %1482 = vmatpush1.msra.mxu0 0.0
      %1483 = vmatprep.subr.mxu0 0.0
      %1484 = vmatpush1.msra.mxu0 0.0
      %1485 = vmatprep.subr.mxu0 0.0
      %1486 = vmatpush1.msra.mxu0 0.0
      %1487 = vmatprep.subr.mxu0 0.0
      %1488 = vmatpush1.msra.mxu0 0.0
      %1489 = vmatprep.subr.mxu0 0.0
      %1490 = vmatpush1.msra.mxu0 0.0
      %1491 = vmatprep.subr.mxu0 0.0
      %1492 = vmatpush1.msra.mxu0 0.0
      %1493 = vmatprep.subr.mxu0 0.0
      %1494 = vmatpush1.msra.mxu0 0.0
      %1495 = vmatprep.subr.mxu0 0.0
      %1496 = vmatpush1.msra.mxu0 0.0
      %1497 = vmatprep.subr.mxu0 0.0
      %1498 = vmatpush1.msra.mxu0 0.0
      %1499 = vmatprep.subr.mxu0 0.0
      %1500 = vmatpush1.msra.mxu0 0.0
      %1501 = vmatprep.subr.mxu0 0.0
      %1502 = vmatpush1.msra.mxu0 0.0
      %1503 = vmatprep.subr.mxu0 0.0
      %1504 = vmatpush1.msra.mxu0 0.0
      %1505 = vmatprep.subr.mxu0 0.0
      %1506 = vmatpush1.msra.mxu0 0.0
      %1507 = vmatprep.subr.mxu0 0.0
      %1508 = vmatpush1.msra.mxu0 0.0
      %1509 = vmatprep.subr.mxu0 0.0
      %1510 = vmatpush1.msra.mxu0 0.0
      %1511 = vmatprep.subr.mxu0 0.0
      %1512 = vmatpush1.msra.mxu0 0.0
      %1513 = vmatprep.subr.mxu0 0.0
      %1514 = vmatpush1.msra.mxu0 0.0
      %1515 = vmatprep.subr.mxu0 0.0
      %1516 = vmatpush1.msra.mxu0 0.0
      %1517 = vmatprep.mubr.f32.mxu0 0.0
      %v1518 = vand.u32 %v1278, 4294901760
      %v1519 = vsub.f32 %v1278, %v1518
      %1520 = vmatmul.mubr.f32.gmra.mrb[0].mxu0 %v1519
      %v1521 = vpop.f32.mrb[0].mxu0
      %v1522 = vadd.f32 %v1444, %v1521
      %v1523 = vpop.f32.mrb[0].mxu0
      %1524 = vdwg.mxu0
      %1525 = vmatprep.subr.mxu0 0.0
      %v1526 = vand.u32 %v1266, 4294901760
      %1527 = vmatpush1.msra.mxu0 %v1526
      %1528 = vmatprep.subr.mxu0 0.0
      %v1529 = vand.u32 %v1267, 4294901760
      %1530 = vmatpush1.msra.mxu0 %v1529
      %1531 = vmatprep.subr.mxu0 0.0
      %v1532 = vand.u32 %v1281, 4294901760
      %1533 = vmatpush1.msra.mxu0 %v1532
      %1534 = vmatprep.subr.mxu0 0.0
      %1535 = vmatpush1.msra.mxu0 0.0
      %1536 = vmatprep.subr.mxu0 0.0
      %1537 = vmatpush1.msra.mxu0 0.0
      %1538 = vmatprep.subr.mxu0 0.0
      %1539 = vmatpush1.msra.mxu0 0.0
      %1540 = vmatprep.subr.mxu0 0.0
      %1541 = vmatpush1.msra.mxu0 0.0
      %1542 = vmatprep.subr.mxu0 0.0
      %1543 = vmatpush1.msra.mxu0 0.0
      %1544 = vmatprep.subr.mxu0 0.0
      %1545 = vmatpush1.msra.mxu0 0.0
      %1546 = vmatprep.subr.mxu0 0.0
      %1547 = vmatpush1.msra.mxu0 0.0
      %1548 = vmatprep.subr.mxu0 0.0
      %1549 = vmatpush1.msra.mxu0 0.0
      %1550 = vmatprep.subr.mxu0 0.0
      %1551 = vmatpush1.msra.mxu0 0.0
      %1552 = vmatprep.subr.mxu0 0.0
      %1553 = vmatpush1.msra.mxu0 0.0
      %1554 = vmatprep.subr.mxu0 0.0
      %1555 = vmatpush1.msra.mxu0 0.0
      %1556 = vmatprep.subr.mxu0 0.0
      %1557 = vmatpush1.msra.mxu0 0.0
      %1558 = vmatprep.subr.mxu0 0.0
      %1559 = vmatpush1.msra.mxu0 0.0
      %1560 = vmatprep.subr.mxu0 0.0
      %1561 = vmatpush1.msra.mxu0 0.0
      %1562 = vmatprep.subr.mxu0 0.0
      %1563 = vmatpush1.msra.mxu0 0.0
      %1564 = vmatprep.subr.mxu0 0.0
      %1565 = vmatpush1.msra.mxu0 0.0
      %1566 = vmatprep.subr.mxu0 0.0
      %1567 = vmatpush1.msra.mxu0 0.0
      %1568 = vmatprep.subr.mxu0 0.0
      %1569 = vmatpush1.msra.mxu0 0.0
      %1570 = vmatprep.subr.mxu0 0.0
      %1571 = vmatpush1.msra.mxu0 0.0
      %1572 = vmatprep.subr.mxu0 0.0
      %1573 = vmatpush1.msra.mxu0 0.0
      %1574 = vmatprep.subr.mxu0 0.0
      %1575 = vmatpush1.msra.mxu0 0.0
      %1576 = vmatprep.subr.mxu0 0.0
      %1577 = vmatpush1.msra.mxu0 0.0
      %1578 = vmatprep.subr.mxu0 0.0
      %1579 = vmatpush1.msra.mxu0 0.0
      %1580 = vmatprep.subr.mxu0 0.0
      %1581 = vmatpush1.msra.mxu0 0.0
      %1582 = vmatprep.subr.mxu0 0.0
      %1583 = vmatpush1.msra.mxu0 0.0
      %1584 = vmatprep.subr.mxu0 0.0
      %1585 = vmatpush1.msra.mxu0 0.0
      %1586 = vmatprep.subr.mxu0 0.0
      %1587 = vmatpush1.msra.mxu0 0.0
      %1588 = vmatprep.subr.mxu0 0.0
      %1589 = vmatpush1.msra.mxu0 0.0
      %1590 = vmatprep.subr.mxu0 0.0
      %1591 = vmatpush1.msra.mxu0 0.0
      %1592 = vmatprep.mubr.f32.mxu0 0.0
      %v1593 = vand.u32 %v1278, 4294901760
      %v1594 = vsub.f32 %v1278, %v1593
      %v1595 = vand.u32 %v1594, 4294901760
      %1596 = vmatmul.mubr.f32.gmra.mrb[0].mxu0 %v1595
      %v1597 = vpop.f32.mrb[0].mxu0
      %v1598 = vadd.f32 %v1522, %v1597
      %v1599 = vpop.f32.mrb[0].mxu0
      %1600 = vdwg.mxu0
      %1601 = vmatprep.subr.mxu0 0.0
      %v1602 = vand.u32 %v1266, 4294901760
      %v1603 = vsub.f32 %v1266, %v1602
      %v1604 = vand.u32 %v1603, 4294901760
      %1605 = vmatpush1.msra.mxu0 %v1604
      %1606 = vmatprep.subr.mxu0 0.0
      %v1607 = vand.u32 %v1267, 4294901760
      %v1608 = vsub.f32 %v1267, %v1607
      %v1609 = vand.u32 %v1608, 4294901760
      %1610 = vmatpush1.msra.mxu0 %v1609
      %1611 = vmatprep.subr.mxu0 0.0
      %v1612 = vand.u32 %v1281, 4294901760
      %v1613 = vsub.f32 %v1281, %v1612
      %v1614 = vand.u32 %v1613, 4294901760
      %1615 = vmatpush1.msra.mxu0 %v1614
      %1616 = vmatprep.subr.mxu0 0.0
      %1617 = vmatpush1.msra.mxu0 0.0
      %1618 = vmatprep.subr.mxu0 0.0
      %1619 = vmatpush1.msra.mxu0 0.0
      %1620 = vmatprep.subr.mxu0 0.0
      %1621 = vmatpush1.msra.mxu0 0.0
      %1622 = vmatprep.subr.mxu0 0.0
      %1623 = vmatpush1.msra.mxu0 0.0
      %1624 = vmatprep.subr.mxu0 0.0
      %1625 = vmatpush1.msra.mxu0 0.0
      %1626 = vmatprep.subr.mxu0 0.0
      %1627 = vmatpush1.msra.mxu0 0.0
      %1628 = vmatprep.subr.mxu0 0.0
      %1629 = vmatpush1.msra.mxu0 0.0
      %1630 = vmatprep.subr.mxu0 0.0
      %1631 = vmatpush1.msra.mxu0 0.0
      %1632 = vmatprep.subr.mxu0 0.0
      %1633 = vmatpush1.msra.mxu0 0.0
      %1634 = vmatprep.subr.mxu0 0.0
      %1635 = vmatpush1.msra.mxu0 0.0
      %1636 = vmatprep.subr.mxu0 0.0
      %1637 = vmatpush1.msra.mxu0 0.0
      %1638 = vmatprep.subr.mxu0 0.0
      %1639 = vmatpush1.msra.mxu0 0.0
      %1640 = vmatprep.subr.mxu0 0.0
      %1641 = vmatpush1.msra.mxu0 0.0
      %1642 = vmatprep.subr.mxu0 0.0
      %1643 = vmatpush1.msra.mxu0 0.0
      %1644 = vmatprep.subr.mxu0 0.0
      %1645 = vmatpush1.msra.mxu0 0.0
      %1646 = vmatprep.subr.mxu0 0.0
      %1647 = vmatpush1.msra.mxu0 0.0
      %1648 = vmatprep.subr.mxu0 0.0
      %1649 = vmatpush1.msra.mxu0 0.0
      %1650 = vmatprep.subr.mxu0 0.0
      %1651 = vmatpush1.msra.mxu0 0.0
      %1652 = vmatprep.subr.mxu0 0.0
      %1653 = vmatpush1.msra.mxu0 0.0
      %1654 = vmatprep.subr.mxu0 0.0
      %1655 = vmatpush1.msra.mxu0 0.0
      %1656 = vmatprep.subr.mxu0 0.0
      %1657 = vmatpush1.msra.mxu0 0.0
      %1658 = vmatprep.subr.mxu0 0.0
      %1659 = vmatpush1.msra.mxu0 0.0
      %1660 = vmatprep.subr.mxu0 0.0
      %1661 = vmatpush1.msra.mxu0 0.0
      %1662 = vmatprep.subr.mxu0 0.0
      %1663 = vmatpush1.msra.mxu0 0.0
      %1664 = vmatprep.subr.mxu0 0.0
      %1665 = vmatpush1.msra.mxu0 0.0
      %1666 = vmatprep.subr.mxu0 0.0
      %1667 = vmatpush1.msra.mxu0 0.0
      %1668 = vmatprep.subr.mxu0 0.0
      %1669 = vmatpush1.msra.mxu0 0.0
      %1670 = vmatprep.subr.mxu0 0.0
      %1671 = vmatpush1.msra.mxu0 0.0
      %1672 = vmatprep.subr.mxu0 0.0
      %1673 = vmatpush1.msra.mxu0 0.0
      %1674 = vmatprep.mubr.f32.mxu0 0.0
      %v1675 = vand.u32 %v1278, 4294901760
      %1676 = vmatmul.mubr.f32.gmra.mrb[0].mxu0 %v1675
      %v1677 = vpop.f32.mrb[0].mxu0
      %v1678 = vadd.f32 %v1598, %v1677
      %v1679 = vpop.f32.mrb[0].mxu0
      %1680 = vdwg.mxu0
      %1681 = vmatprep.subr.mxu0 0.0
      %v1682 = vand.u32 %v1266, 4294901760
      %1683 = vmatpush1.msra.mxu0 %v1682
      %1684 = vmatprep.subr.mxu0 0.0
      %v1685 = vand.u32 %v1267, 4294901760
      %1686 = vmatpush1.msra.mxu0 %v1685
      %1687 = vmatprep.subr.mxu0 0.0
      %v1688 = vand.u32 %v1281, 4294901760
      %1689 = vmatpush1.msra.mxu0 %v1688
      %1690 = vmatprep.subr.mxu0 0.0
      %1691 = vmatpush1.msra.mxu0 0.0
      %1692 = vmatprep.subr.mxu0 0.0
      %1693 = vmatpush1.msra.mxu0 0.0
      %1694 = vmatprep.subr.mxu0 0.0
      %1695 = vmatpush1.msra.mxu0 0.0
      %1696 = vmatprep.subr.mxu0 0.0
      %1697 = vmatpush1.msra.mxu0 0.0
      %1698 = vmatprep.subr.mxu0 0.0
      %1699 = vmatpush1.msra.mxu0 0.0
      %1700 = vmatprep.subr.mxu0 0.0
      %1701 = vmatpush1.msra.mxu0 0.0
      %1702 = vmatprep.subr.mxu0 0.0
      %1703 = vmatpush1.msra.mxu0 0.0
      %1704 = vmatprep.subr.mxu0 0.0
      %1705 = vmatpush1.msra.mxu0 0.0
      %1706 = vmatprep.subr.mxu0 0.0
      %1707 = vmatpush1.msra.mxu0 0.0
      %1708 = vmatprep.subr.mxu0 0.0
      %1709 = vmatpush1.msra.mxu0 0.0
      %1710 = vmatprep.subr.mxu0 0.0
      %1711 = vmatpush1.msra.mxu0 0.0
      %1712 = vmatprep.subr.mxu0 0.0
      %1713 = vmatpush1.msra.mxu0 0.0
      %1714 = vmatprep.subr.mxu0 0.0
      %1715 = vmatpush1.msra.mxu0 0.0
      %1716 = vmatprep.subr.mxu0 0.0
      %1717 = vmatpush1.msra.mxu0 0.0
      %1718 = vmatprep.subr.mxu0 0.0
      %1719 = vmatpush1.msra.mxu0 0.0
      %1720 = vmatprep.subr.mxu0 0.0
      %1721 = vmatpush1.msra.mxu0 0.0
      %1722 = vmatprep.subr.mxu0 0.0
      %1723 = vmatpush1.msra.mxu0 0.0
      %1724 = vmatprep.subr.mxu0 0.0
      %1725 = vmatpush1.msra.mxu0 0.0
      %1726 = vmatprep.subr.mxu0 0.0
      %1727 = vmatpush1.msra.mxu0 0.0
      %1728 = vmatprep.subr.mxu0 0.0
      %1729 = vmatpush1.msra.mxu0 0.0
      %1730 = vmatprep.subr.mxu0 0.0
      %1731 = vmatpush1.msra.mxu0 0.0
      %1732 = vmatprep.subr.mxu0 0.0
      %1733 = vmatpush1.msra.mxu0 0.0
      %1734 = vmatprep.subr.mxu0 0.0
      %1735 = vmatpush1.msra.mxu0 0.0
      %1736 = vmatprep.subr.mxu0 0.0
      %1737 = vmatpush1.msra.mxu0 0.0
      %1738 = vmatprep.subr.mxu0 0.0
      %1739 = vmatpush1.msra.mxu0 0.0
      %1740 = vmatprep.subr.mxu0 0.0
      %1741 = vmatpush1.msra.mxu0 0.0
      %1742 = vmatprep.subr.mxu0 0.0
      %1743 = vmatpush1.msra.mxu0 0.0
      %1744 = vmatprep.subr.mxu0 0.0
      %1745 = vmatpush1.msra.mxu0 0.0
      %1746 = vmatprep.subr.mxu0 0.0
      %1747 = vmatpush1.msra.mxu0 0.0
      %1748 = vmatprep.mubr.f32.mxu0 0.0
      %v1749 = vand.u32 %v1278, 4294901760
      %1750 = vmatmul.mubr.f32.gmra.mrb[0].mxu0 %v1749
      %v1751 = vpop.f32.mrb[0].mxu0
      %v1752 = vadd.f32 %v1678, %v1751
      %v1753 = vpop.f32.mrb[0].mxu0
      %1754 = vdwg.mxu0
      %v1755 = vmax.f32 %v1752, 0.0
      %v1756 = vld [vmem:[%s7] sm:$0xff]
      %v1757 = vld [vmem:[%s7 + $0x8] sm:$0xff]
      %v1758 = vld [vmem:[%s7 + $0x10] sm:$0xf]
      %v1759 = vld [vmem:[%s8] sm:$0x1]
      %v1761 = vlaneseq
      %v1762 = vshrl.u32 %v1761, 7
      %v1763 = vsub.s32 0, %v1762
      %v1764 = vrot.slane %v1759, %v1763
      %v1767 = vsel %vm1276, %v1755, 0
      %v1770 = vsel %vm353, %v1758, 0
      %1772 = vmatprep.subr.mxu0 0.0
      %v1773 = vand.u32 %v1756, 4294901760
      %1774 = vmatpush1.msra.mxu0 %v1773
      %1775 = vmatprep.subr.mxu0 0.0
      %v1776 = vand.u32 %v1757, 4294901760
      %1777 = vmatpush1.msra.mxu0 %v1776
      %1778 = vmatprep.subr.mxu0 0.0
      %v1779 = vand.u32 %v1770, 4294901760
      %1780 = vmatpush1.msra.mxu0 %v1779
      %1781 = vmatprep.subr.mxu0 0.0
      %1782 = vmatpush1.msra.mxu0 0.0
      %1783 = vmatprep.subr.mxu0 0.0
      %1784 = vmatpush1.msra.mxu0 0.0
      %1785 = vmatprep.subr.mxu0 0.0
      %1786 = vmatpush1.msra.mxu0 0.0
      %1787 = vmatprep.subr.mxu0 0.0
      %1788 = vmatpush1.msra.mxu0 0.0
      %1789 = vmatprep.subr.mxu0 0.0
      %1790 = vmatpush1.msra.mxu0 0.0
      %1791 = vmatprep.subr.mxu0 0.0
      %1792 = vmatpush1.msra.mxu0 0.0
      %1793 = vmatprep.subr.mxu0 0.0
      %1794 = vmatpush1.msra.mxu0 0.0
      %1795 = vmatprep.subr.mxu0 0.0
      %1796 = vmatpush1.msra.mxu0 0.0
      %1797 = vmatprep.subr.mxu0 0.0
      %1798 = vmatpush1.msra.mxu0 0.0
      %1799 = vmatprep.subr.mxu0 0.0
      %1800 = vmatpush1.msra.mxu0 0.0
      %1801 = vmatprep.subr.mxu0 0.0
      %1802 = vmatpush1.msra.mxu0 0.0
      %1803 = vmatprep.subr.mxu0 0.0
      %1804 = vmatpush1.msra.mxu0 0.0
      %1805 = vmatprep.subr.mxu0 0.0
      %1806 = vmatpush1.msra.mxu0 0.0
      %1807 = vmatprep.subr.mxu0 0.0
      %1808 = vmatpush1.msra.mxu0 0.0
      %1809 = vmatprep.subr.mxu0 0.0
      %1810 = vmatpush1.msra.mxu0 0.0
      %1811 = vmatprep.subr.mxu0 0.0
      %1812 = vmatpush1.msra.mxu0 0.0
      %1813 = vmatprep.subr.mxu0 0.0
      %1814 = vmatpush1.msra.mxu0 0.0
      %1815 = vmatprep.subr.mxu0 0.0
      %1816 = vmatpush1.msra.mxu0 0.0
      %1817 = vmatprep.subr.mxu0 0.0
      %1818 = vmatpush1.msra.mxu0 0.0
      %1819 = vmatprep.subr.mxu0 0.0
      %1820 = vmatpush1.msra.mxu0 0.0
      %1821 = vmatprep.subr.mxu0 0.0
      %1822 = vmatpush1.msra.mxu0 0.0
      %1823 = vmatprep.subr.mxu0 0.0
      %1824 = vmatpush1.msra.mxu0 0.0
      %1825 = vmatprep.subr.mxu0 0.0
      %1826 = vmatpush1.msra.mxu0 0.0
      %1827 = vmatprep.subr.mxu0 0.0
      %1828 = vmatpush1.msra.mxu0 0.0
      %1829 = vmatprep.subr.mxu0 0.0
      %1830 = vmatpush1.msra.mxu0 0.0
      %1831 = vmatprep.subr.mxu0 0.0
      %1832 = vmatpush1.msra.mxu0 0.0
      %1833 = vmatprep.subr.mxu0 0.0
      %1834 = vmatpush1.msra.mxu0 0.0
      %1835 = vmatprep.subr.mxu0 0.0
      %1836 = vmatpush1.msra.mxu0 0.0
      %1837 = vmatprep.subr.mxu0 0.0
      %1838 = vmatpush1.msra.mxu0 0.0
      %1839 = vmatprep.mubr.f32.mxu0 0.0
      %v1840 = vand.u32 %v1767, 4294901760
      %v1841 = vsub.f32 %v1767, %v1840
      %v1842 = vand.u32 %v1841, 4294901760
      %v1843 = vsub.f32 %v1841, %v1842
      %v1844 = vand.u32 %v1843, 4294901760
      %1845 = vmatmul.mubr.f32.gmra.mrb[0].mxu0 %v1844
      %v1846 = vpop.f32.mrb[0].mxu0
      %v1847 = vadd.f32 %v1764, %v1846
      %v1848 = vpop.f32.mrb[0].mxu0
      %1849 = vdwg.mxu0
      %1850 = vmatprep.subr.mxu0 0.0
      %v1851 = vand.u32 %v1756, 4294901760
      %v1852 = vsub.f32 %v1756, %v1851
      %v1853 = vand.u32 %v1852, 4294901760
      %v1854 = vsub.f32 %v1852, %v1853
      %v1855 = vand.u32 %v1854, 4294901760
      %1856 = vmatpush1.msra.mxu0 %v1855
      %1857 = vmatprep.subr.mxu0 0.0
      %v1858 = vand.u32 %v1757, 4294901760
      %v1859 = vsub.f32 %v1757, %v1858
      %v1860 = vand.u32 %v1859, 4294901760
      %v1861 = vsub.f32 %v1859, %v1860
      %v1862 = vand.u32 %v1861, 4294901760
      %1863 = vmatpush1.msra.mxu0 %v1862
      %1864 = vmatprep.subr.mxu0 0.0
      %v1865 = vand.u32 %v1770, 4294901760
      %v1866 = vsub.f32 %v1770, %v1865
      %v1867 = vand.u32 %v1866, 4294901760
      %v1868 = vsub.f32 %v1866, %v1867
      %v1869 = vand.u32 %v1868, 4294901760
      %1870 = vmatpush1.msra.mxu0 %v1869
      %1871 = vmatprep.subr.mxu0 0.0
      %1872 = vmatpush1.msra.mxu0 0.0
      %1873 = vmatprep.subr.mxu0 0.0
      %1874 = vmatpush1.msra.mxu0 0.0
      %1875 = vmatprep.subr.mxu0 0.0
      %1876 = vmatpush1.msra.mxu0 0.0
      %1877 = vmatprep.subr.mxu0 0.0
      %1878 = vmatpush1.msra.mxu0 0.0
      %1879 = vmatprep.subr.mxu0 0.0
      %1880 = vmatpush1.msra.mxu0 0.0
      %1881 = vmatprep.subr.mxu0 0.0
      %1882 = vmatpush1.msra.mxu0 0.0
      %1883 = vmatprep.subr.mxu0 0.0
      %1884 = vmatpush1.msra.mxu0 0.0
      %1885 = vmatprep.subr.mxu0 0.0
      %1886 = vmatpush1.msra.mxu0 0.0
      %1887 = vmatprep.subr.mxu0 0.0
      %1888 = vmatpush1.msra.mxu0 0.0
      %1889 = vmatprep.subr.mxu0 0.0
      %1890 = vmatpush1.msra.mxu0 0.0
      %1891 = vmatprep.subr.mxu0 0.0
      %1892 = vmatpush1.msra.mxu0 0.0
      %1893 = vmatprep.subr.mxu0 0.0
      %1894 = vmatpush1.msra.mxu0 0.0
      %1895 = vmatprep.subr.mxu0 0.0
      %1896 = vmatpush1.msra.mxu0 0.0
      %1897 = vmatprep.subr.mxu0 0.0
      %1898 = vmatpush1.msra.mxu0 0.0
      %1899 = vmatprep.subr.mxu0 0.0
      %1900 = vmatpush1.msra.mxu0 0.0
      %1901 = vmatprep.subr.mxu0 0.0
      %1902 = vmatpush1.msra.mxu0 0.0
      %1903 = vmatprep.subr.mxu0 0.0
      %1904 = vmatpush1.msra.mxu0 0.0
      %1905 = vmatprep.subr.mxu0 0.0
      %1906 = vmatpush1.msra.mxu0 0.0
      %1907 = vmatprep.subr.mxu0 0.0
      %1908 = vmatpush1.msra.mxu0 0.0
      %1909 = vmatprep.subr.mxu0 0.0
      %1910 = vmatpush1.msra.mxu0 0.0
      %1911 = vmatprep.subr.mxu0 0.0
      %1912 = vmatpush1.msra.mxu0 0.0
      %1913 = vmatprep.subr.mxu0 0.0
      %1914 = vmatpush1.msra.mxu0 0.0
      %1915 = vmatprep.subr.mxu0 0.0
      %1916 = vmatpush1.msra.mxu0 0.0
      %1917 = vmatprep.subr.mxu0 0.0
      %1918 = vmatpush1.msra.mxu0 0.0
      %1919 = vmatprep.subr.mxu0 0.0
      %1920 = vmatpush1.msra.mxu0 0.0
      %1921 = vmatprep.subr.mxu0 0.0
      %1922 = vmatpush1.msra.mxu0 0.0
      %1923 = vmatprep.subr.mxu0 0.0
      %1924 = vmatpush1.msra.mxu0 0.0
      %1925 = vmatprep.subr.mxu0 0.0
      %1926 = vmatpush1.msra.mxu0 0.0
      %1927 = vmatprep.subr.mxu0 0.0
      %1928 = vmatpush1.msra.mxu0 0.0
      %1929 = vmatprep.mubr.f32.mxu0 0.0
      %v1930 = vand.u32 %v1767, 4294901760
      %1931 = vmatmul.mubr.f32.gmra.mrb[0].mxu0 %v1930
      %v1932 = vpop.f32.mrb[0].mxu0
      %v1933 = vadd.f32 %v1847, %v1932
      %v1934 = vpop.f32.mrb[0].mxu0
      %1935 = vdwg.mxu0
      %1936 = vmatprep.subr.mxu0 0.0
      %v1937 = vand.u32 %v1756, 4294901760
      %v1938 = vsub.f32 %v1756, %v1937
      %1939 = vmatpush1.msra.mxu0 %v1938
      %1940 = vmatprep.subr.mxu0 0.0
      %v1941 = vand.u32 %v1757, 4294901760
      %v1942 = vsub.f32 %v1757, %v1941
      %1943 = vmatpush1.msra.mxu0 %v1942
      %1944 = vmatprep.subr.mxu0 0.0
      %v1945 = vand.u32 %v1770, 4294901760
      %v1946 = vsub.f32 %v1770, %v1945
      %1947 = vmatpush1.msra.mxu0 %v1946
      %1948 = vmatprep.subr.mxu0 0.0
      %1949 = vmatpush1.msra.mxu0 0.0
      %1950 = vmatprep.subr.mxu0 0.0
      %1951 = vmatpush1.msra.mxu0 0.0
      %1952 = vmatprep.subr.mxu0 0.0
      %1953 = vmatpush1.msra.mxu0 0.0
      %1954 = vmatprep.subr.mxu0 0.0
      %1955 = vmatpush1.msra.mxu0 0.0
      %1956 = vmatprep.subr.mxu0 0.0
      %1957 = vmatpush1.msra.mxu0 0.0
      %1958 = vmatprep.subr.mxu0 0.0
      %1959 = vmatpush1.msra.mxu0 0.0
      %1960 = vmatprep.subr.mxu0 0.0
      %1961 = vmatpush1.msra.mxu0 0.0
      %1962 = vmatprep.subr.mxu0 0.0
      %1963 = vmatpush1.msra.mxu0 0.0
      %1964 = vmatprep.subr.mxu0 0.0
      %1965 = vmatpush1.msra.mxu0 0.0
      %1966 = vmatprep.subr.mxu0 0.0
      %1967 = vmatpush1.msra.mxu0 0.0
      %1968 = vmatprep.subr.mxu0 0.0
      %1969 = vmatpush1.msra.mxu0 0.0
      %1970 = vmatprep.subr.mxu0 0.0
      %1971 = vmatpush1.msra.mxu0 0.0
      %1972 = vmatprep.subr.mxu0 0.0
      %1973 = vmatpush1.msra.mxu0 0.0
      %1974 = vmatprep.subr.mxu0 0.0
      %1975 = vmatpush1.msra.mxu0 0.0
      %1976 = vmatprep.subr.mxu0 0.0
      %1977 = vmatpush1.msra.mxu0 0.0
      %1978 = vmatprep.subr.mxu0 0.0
      %1979 = vmatpush1.msra.mxu0 0.0
      %1980 = vmatprep.subr.mxu0 0.0
      %1981 = vmatpush1.msra.mxu0 0.0
      %1982 = vmatprep.subr.mxu0 0.0
      %1983 = vmatpush1.msra.mxu0 0.0
      %1984 = vmatprep.subr.mxu0 0.0
      %1985 = vmatpush1.msra.mxu0 0.0
      %1986 = vmatprep.subr.mxu0 0.0
      %1987 = vmatpush1.msra.mxu0 0.0
      %1988 = vmatprep.subr.mxu0 0.0
      %1989 = vmatpush1.msra.mxu0 0.0
      %1990 = vmatprep.subr.mxu0 0.0
      %1991 = vmatpush1.msra.mxu0 0.0
      %1992 = vmatprep.subr.mxu0 0.0
      %1993 = vmatpush1.msra.mxu0 0.0
      %1994 = vmatprep.subr.mxu0 0.0
      %1995 = vmatpush1.msra.mxu0 0.0
      %1996 = vmatprep.subr.mxu0 0.0
      %1997 = vmatpush1.msra.mxu0 0.0
      %1998 = vmatprep.subr.mxu0 0.0
      %1999 = vmatpush1.msra.mxu0 0.0
      %2000 = vmatprep.subr.mxu0 0.0
      %2001 = vmatpush1.msra.mxu0 0.0
      %2002 = vmatprep.subr.mxu0 0.0
      %2003 = vmatpush1.msra.mxu0 0.0
      %2004 = vmatprep.subr.mxu0 0.0
      %2005 = vmatpush1.msra.mxu0 0.0
      %2006 = vmatprep.mubr.f32.mxu0 0.0
      %v2007 = vand.u32 %v1767, 4294901760
      %v2008 = vsub.f32 %v1767, %v2007
      %2009 = vmatmul.mubr.f32.gmra.mrb[0].mxu0 %v2008
      %v2010 = vpop.f32.mrb[0].mxu0
      %v2011 = vadd.f32 %v1933, %v2010
      %v2012 = vpop.f32.mrb[0].mxu0
      %2013 = vdwg.mxu0
      %2014 = vmatprep.subr.mxu0 0.0
      %v2015 = vand.u32 %v1756, 4294901760
      %2016 = vmatpush1.msra.mxu0 %v2015
      %2017 = vmatprep.subr.mxu0 0.0
      %v2018 = vand.u32 %v1757, 4294901760
      %2019 = vmatpush1.msra.mxu0 %v2018
      %2020 = vmatprep.subr.mxu0 0.0
      %v2021 = vand.u32 %v1770, 4294901760
      %2022 = vmatpush1.msra.mxu0 %v2021
      %2023 = vmatprep.subr.mxu0 0.0
      %2024 = vmatpush1.msra.mxu0 0.0
      %2025 = vmatprep.subr.mxu0 0.0
      %2026 = vmatpush1.msra.mxu0 0.0
      %2027 = vmatprep.subr.mxu0 0.0
      %2028 = vmatpush1.msra.mxu0 0.0
      %2029 = vmatprep.subr.mxu0 0.0
      %2030 = vmatpush1.msra.mxu0 0.0
      %2031 = vmatprep.subr.mxu0 0.0
      %2032 = vmatpush1.msra.mxu0 0.0
      %2033 = vmatprep.subr.mxu0 0.0
      %2034 = vmatpush1.msra.mxu0 0.0
      %2035 = vmatprep.subr.mxu0 0.0
      %2036 = vmatpush1.msra.mxu0 0.0
      %2037 = vmatprep.subr.mxu0 0.0
      %2038 = vmatpush1.msra.mxu0 0.0
      %2039 = vmatprep.subr.mxu0 0.0
      %2040 = vmatpush1.msra.mxu0 0.0
      %2041 = vmatprep.subr.mxu0 0.0
      %2042 = vmatpush1.msra.mxu0 0.0
      %2043 = vmatprep.subr.mxu0 0.0
      %2044 = vmatpush1.msra.mxu0 0.0
      %2045 = vmatprep.subr.mxu0 0.0
      %2046 = vmatpush1.msra.mxu0 0.0
      %2047 = vmatprep.subr.mxu0 0.0
      %2048 = vmatpush1.msra.mxu0 0.0
      %2049 = vmatprep.subr.mxu0 0.0
      %2050 = vmatpush1.msra.mxu0 0.0
      %2051 = vmatprep.subr.mxu0 0.0
      %2052 = vmatpush1.msra.mxu0 0.0
      %2053 = vmatprep.subr.mxu0 0.0
      %2054 = vmatpush1.msra.mxu0 0.0
      %2055 = vmatprep.subr.mxu0 0.0
      %2056 = vmatpush1.msra.mxu0 0.0
      %2057 = vmatprep.subr.mxu0 0.0
      %2058 = vmatpush1.msra.mxu0 0.0
      %2059 = vmatprep.subr.mxu0 0.0
      %2060 = vmatpush1.msra.mxu0 0.0
      %2061 = vmatprep.subr.mxu0 0.0
      %2062 = vmatpush1.msra.mxu0 0.0
      %2063 = vmatprep.subr.mxu0 0.0
      %2064 = vmatpush1.msra.mxu0 0.0
      %2065 = vmatprep.subr.mxu0 0.0
      %2066 = vmatpush1.msra.mxu0 0.0
      %2067 = vmatprep.subr.mxu0 0.0
      %2068 = vmatpush1.msra.mxu0 0.0
      %2069 = vmatprep.subr.mxu0 0.0
      %2070 = vmatpush1.msra.mxu0 0.0
      %2071 = vmatprep.subr.mxu0 0.0
      %2072 = vmatpush1.msra.mxu0 0.0
      %2073 = vmatprep.subr.mxu0 0.0
      %2074 = vmatpush1.msra.mxu0 0.0
      %2075 = vmatprep.subr.mxu0 0.0
      %2076 = vmatpush1.msra.mxu0 0.0
      %2077 = vmatprep.subr.mxu0 0.0
      %2078 = vmatpush1.msra.mxu0 0.0
      %2079 = vmatprep.subr.mxu0 0.0
      %2080 = vmatpush1.msra.mxu0 0.0
      %2081 = vmatprep.mubr.f32.mxu0 0.0
      %v2082 = vand.u32 %v1767, 4294901760
      %v2083 = vsub.f32 %v1767, %v2082
      %v2084 = vand.u32 %v2083, 4294901760
      %2085 = vmatmul.mubr.f32.gmra.mrb[0].mxu0 %v2084
      %v2086 = vpop.f32.mrb[0].mxu0
      %v2087 = vadd.f32 %v2011, %v2086
      %v2088 = vpop.f32.mrb[0].mxu0
      %2089 = vdwg.mxu0
      %2090 = vmatprep.subr.mxu0 0.0
      %v2091 = vand.u32 %v1756, 4294901760
      %v2092 = vsub.f32 %v1756, %v2091
      %v2093 = vand.u32 %v2092, 4294901760
      %2094 = vmatpush1.msra.mxu0 %v2093
      %2095 = vmatprep.subr.mxu0 0.0
      %v2096 = vand.u32 %v1757, 4294901760
      %v2097 = vsub.f32 %v1757, %v2096
      %v2098 = vand.u32 %v2097, 4294901760
      %2099 = vmatpush1.msra.mxu0 %v2098
      %2100 = vmatprep.subr.mxu0 0.0
      %v2101 = vand.u32 %v1770, 4294901760
      %v2102 = vsub.f32 %v1770, %v2101
      %v2103 = vand.u32 %v2102, 4294901760
      %2104 = vmatpush1.msra.mxu0 %v2103
      %2105 = vmatprep.subr.mxu0 0.0
      %2106 = vmatpush1.msra.mxu0 0.0
      %2107 = vmatprep.subr.mxu0 0.0
      %2108 = vmatpush1.msra.mxu0 0.0
      %2109 = vmatprep.subr.mxu0 0.0
      %2110 = vmatpush1.msra.mxu0 0.0
      %2111 = vmatprep.subr.mxu0 0.0
      %2112 = vmatpush1.msra.mxu0 0.0
      %2113 = vmatprep.subr.mxu0 0.0
      %2114 = vmatpush1.msra.mxu0 0.0
      %2115 = vmatprep.subr.mxu0 0.0
      %2116 = vmatpush1.msra.mxu0 0.0
      %2117 = vmatprep.subr.mxu0 0.0
      %2118 = vmatpush1.msra.mxu0 0.0
      %2119 = vmatprep.subr.mxu0 0.0
      %2120 = vmatpush1.msra.mxu0 0.0
      %2121 = vmatprep.subr.mxu0 0.0
      %2122 = vmatpush1.msra.mxu0 0.0
      %2123 = vmatprep.subr.mxu0 0.0
      %2124 = vmatpush1.msra.mxu0 0.0
      %2125 = vmatprep.subr.mxu0 0.0
      %2126 = vmatpush1.msra.mxu0 0.0
      %2127 = vmatprep.subr.mxu0 0.0
      %2128 = vmatpush1.msra.mxu0 0.0
      %2129 = vmatprep.subr.mxu0 0.0
      %2130 = vmatpush1.msra.mxu0 0.0
      %2131 = vmatprep.subr.mxu0 0.0
      %2132 = vmatpush1.msra.mxu0 0.0
      %2133 = vmatprep.subr.mxu0 0.0
      %2134 = vmatpush1.msra.mxu0 0.0
      %2135 = vmatprep.subr.mxu0 0.0
      %2136 = vmatpush1.msra.mxu0 0.0
      %2137 = vmatprep.subr.mxu0 0.0
      %2138 = vmatpush1.msra.mxu0 0.0
      %2139 = vmatprep.subr.mxu0 0.0
      %2140 = vmatpush1.msra.mxu0 0.0
      %2141 = vmatprep.subr.mxu0 0.0
      %2142 = vmatpush1.msra.mxu0 0.0
      %2143 = vmatprep.subr.mxu0 0.0
      %2144 = vmatpush1.msra.mxu0 0.0
      %2145 = vmatprep.subr.mxu0 0.0
      %2146 = vmatpush1.msra.mxu0 0.0
      %2147 = vmatprep.subr.mxu0 0.0
      %2148 = vmatpush1.msra.mxu0 0.0
      %2149 = vmatprep.subr.mxu0 0.0
      %2150 = vmatpush1.msra.mxu0 0.0
      %2151 = vmatprep.subr.mxu0 0.0
      %2152 = vmatpush1.msra.mxu0 0.0
      %2153 = vmatprep.subr.mxu0 0.0
      %2154 = vmatpush1.msra.mxu0 0.0
      %2155 = vmatprep.subr.mxu0 0.0
      %2156 = vmatpush1.msra.mxu0 0.0
      %2157 = vmatprep.subr.mxu0 0.0
      %2158 = vmatpush1.msra.mxu0 0.0
      %2159 = vmatprep.subr.mxu0 0.0
      %2160 = vmatpush1.msra.mxu0 0.0
      %2161 = vmatprep.subr.mxu0 0.0
      %2162 = vmatpush1.msra.mxu0 0.0
      %2163 = vmatprep.mubr.f32.mxu0 0.0
      %v2164 = vand.u32 %v1767, 4294901760
      %2165 = vmatmul.mubr.f32.gmra.mrb[0].mxu0 %v2164
      %v2166 = vpop.f32.mrb[0].mxu0
      %v2167 = vadd.f32 %v2087, %v2166
      %v2168 = vpop.f32.mrb[0].mxu0
      %2169 = vdwg.mxu0
      %2170 = vmatprep.subr.mxu0 0.0
      %v2171 = vand.u32 %v1756, 4294901760
      %2172 = vmatpush1.msra.mxu0 %v2171
      %2173 = vmatprep.subr.mxu0 0.0
      %v2174 = vand.u32 %v1757, 4294901760
      %2175 = vmatpush1.msra.mxu0 %v2174
      %2176 = vmatprep.subr.mxu0 0.0
      %v2177 = vand.u32 %v1770, 4294901760
      %2178 = vmatpush1.msra.mxu0 %v2177
      %2179 = vmatprep.subr.mxu0 0.0
      %2180 = vmatpush1.msra.mxu0 0.0
      %2181 = vmatprep.subr.mxu0 0.0
      %2182 = vmatpush1.msra.mxu0 0.0
      %2183 = vmatprep.subr.mxu0 0.0
      %2184 = vmatpush1.msra.mxu0 0.0
      %2185 = vmatprep.subr.mxu0 0.0
      %2186 = vmatpush1.msra.mxu0 0.0
      %2187 = vmatprep.subr.mxu0 0.0
      %2188 = vmatpush1.msra.mxu0 0.0
      %2189 = vmatprep.subr.mxu0 0.0
      %2190 = vmatpush1.msra.mxu0 0.0
      %2191 = vmatprep.subr.mxu0 0.0
      %2192 = vmatpush1.msra.mxu0 0.0
      %2193 = vmatprep.subr.mxu0 0.0
      %2194 = vmatpush1.msra.mxu0 0.0
      %2195 = vmatprep.subr.mxu0 0.0
      %2196 = vmatpush1.msra.mxu0 0.0
      %2197 = vmatprep.subr.mxu0 0.0
      %2198 = vmatpush1.msra.mxu0 0.0
      %2199 = vmatprep.subr.mxu0 0.0
      %2200 = vmatpush1.msra.mxu0 0.0
      %2201 = vmatprep.subr.mxu0 0.0
      %2202 = vmatpush1.msra.mxu0 0.0
      %2203 = vmatprep.subr.mxu0 0.0
      %2204 = vmatpush1.msra.mxu0 0.0
      %2205 = vmatprep.subr.mxu0 0.0
      %2206 = vmatpush1.msra.mxu0 0.0
      %2207 = vmatprep.subr.mxu0 0.0
      %2208 = vmatpush1.msra.mxu0 0.0
      %2209 = vmatprep.subr.mxu0 0.0
      %2210 = vmatpush1.msra.mxu0 0.0
      %2211 = vmatprep.subr.mxu0 0.0
      %2212 = vmatpush1.msra.mxu0 0.0
      %2213 = vmatprep.subr.mxu0 0.0
      %2214 = vmatpush1.msra.mxu0 0.0
      %2215 = vmatprep.subr.mxu0 0.0
      %2216 = vmatpush1.msra.mxu0 0.0
      %2217 = vmatprep.subr.mxu0 0.0
      %2218 = vmatpush1.msra.mxu0 0.0
      %2219 = vmatprep.subr.mxu0 0.0
      %2220 = vmatpush1.msra.mxu0 0.0
      %2221 = vmatprep.subr.mxu0 0.0
      %2222 = vmatpush1.msra.mxu0 0.0
      %2223 = vmatprep.subr.mxu0 0.0
      %2224 = vmatpush1.msra.mxu0 0.0
      %2225 = vmatprep.subr.mxu0 0.0
      %2226 = vmatpush1.msra.mxu0 0.0
      %2227 = vmatprep.subr.mxu0 0.0
      %2228 = vmatpush1.msra.mxu0 0.0
      %2229 = vmatprep.subr.mxu0 0.0
      %2230 = vmatpush1.msra.mxu0 0.0
      %2231 = vmatprep.subr.mxu0 0.0
      %2232 = vmatpush1.msra.mxu0 0.0
      %2233 = vmatprep.subr.mxu0 0.0
      %2234 = vmatpush1.msra.mxu0 0.0
      %2235 = vmatprep.subr.mxu0 0.0
      %2236 = vmatpush1.msra.mxu0 0.0
      %2237 = vmatprep.mubr.f32.mxu0 0.0
      %v2238 = vand.u32 %v1767, 4294901760
      %2239 = vmatmul.mubr.f32.gmra.mrb[0].mxu0 %v2238
      %v2240 = vpop.f32.mrb[0].mxu0
      %v2241 = vadd.f32 %v2167, %v2240
      %v2242 = vpop.f32.mrb[0].mxu0
      %2243 = vdwg.mxu0
      %vm2244 = vcmask 15360
      %2245 = vst.msk [vmem:[%s344] sm:$0xff] %vm2244, %v2241
      %p2246 = scmp.lt.s32.totalorder %s20, 1
      %s2247 = scalar_select %p2246, %s20, 1
      %s2248 = smul.addr %s2247, 8
      %s2249 = scalar_lea.vmem %s9, %s2248
      // Predicated region
      $region57: #{tpu_custom_call.1} parent=55 // pred_check
        %p2250 = pneg %p237
      $region58: #{tpu_custom_call.1} parent=55 // pred_check_branch
        %2252 = sbr.rel (%p2250) target = $region60
      $region59: #{tpu_custom_call.1} parent=55 // pred_region
        _
      $region60: #{tpu_custom_call.1} parent=55 // pred_fallthru
        _
    $region56: #{tpu_custom_call.1} parent=5 // pred_fallthru
      _
    %p2253 = scmp.le.s32.totalorder 2, %s15
    // Predicated region
    $region61: #{tpu_custom_call.1} parent=5 // pred_check
      %p2254 = pneg %p2253
    $region62: #{tpu_custom_call.1} parent=5 // pred_check_branch
      %2256 = sbr.rel (%p2254) target = $region64
    $region63: #{tpu_custom_call.1} parent=5 // pred_region
      %s2257 = ssub.s32 %s15, 2
      // Predicated region
      $region65: #{tpu_custom_call.1} parent=63 // pred_check
        %p2258 = pneg %p243
      $region66: #{tpu_custom_call.1} parent=63 // pred_check_branch
        %2260 = sbr.rel (%p2258) target = $region68
      $region67: #{tpu_custom_call.1} parent=63 // pred_region
        %p2261 = scmp.lt.s32.totalorder %s21, 1
        %s2262 = scalar_select %p2261, %s21, 1
        %s2263 = smul.addr %s2262, 8
        %s2264 = scalar_lea.vmem %s9, %s2263
      $region68: #{tpu_custom_call.1} parent=63 // pred_fallthru
        _
    $region64: #{tpu_custom_call.1} parent=5 // pred_fallthru
      _
  $region6: #{tpu_custom_call.1} parent=0 // loop_footer
    %s19 = sadd.s32 1, %s15
  $region7: #{tpu_custom_call.1} parent=0 // loop_footer_branch
    %14 = sbr.rel target = $region3
  $region8: #{tpu_custom_call.1} parent=0 // loop_exit
    _

</llo_original>
